<compile_context>
chip_gen: v7x
topology: tpu7x:2x2x1
jax: 0.10.0
libtpu: 0.0.40
codegen_flags: <defaults>
</compile_context>

<pallas_src>
import math
import functools

import jax
import jax.numpy as jnp
from jax import lax
from jax.experimental import pallas as pl
from jax.experimental.pallas import tpu as pltpu


def _layer_norm(y, g, b):
    mu = jnp.mean(y, axis=-1, keepdims=True)
    var = jnp.mean((y - mu) ** 2, axis=-1, keepdims=True)
    return (y - mu) * lax.rsqrt(var + 1e-5) * g + b


# ----------------------------------------------------------------------------
# Fused kernel: embedding + num_layers encoder layers, one call.
# Grid = (batch_blocks, num_layers); activation lives in VMEM scratch h_ref.
# ----------------------------------------------------------------------------
def _fused_transformer_kernel(
    # inputs ------------------------------------------------------------
    x_ref,                      # (Bt*S, Fin)            f32
    emb_w_ref, emb_b_ref,       # (Fin, H) bf16, (1, H) f32
    wqkv_ref, bqkv_ref,         # (1, H, 3H) bf16, (1, 1, 3H) f32  (q scale folded in)
    wo_ref, bo_ref,             # (1, H, H) bf16, (1, 1, H) f32
    g1_ref, be1_ref,            # (1, 1, H) f32
    w1_ref, b1_ref,             # (1, H, 4H) bf16, (1, 1, 4H) f32
    w2_ref, b2_ref,             # (1, 4H, H) bf16, (1, 1, H) f32
    g2_ref, be2_ref,            # (1, 1, H) f32
    # output ------------------------------------------------------------
    out_ref,                    # (Bt, H) f32  -- last-token hidden state
    # scratch -----------------------------------------------------------
    h_ref,                      # (Bt*S, H) f32  -- activation, resident across layers
    *, num_heads, seq_len, ffn_row_chunk,
):
    layer = pl.program_id(1)
    num_layers = pl.num_programs(1)

    N, H = h_ref.shape          # N = Bt * S
    S = seq_len
    Bt = N // S
    d = H // num_heads

    # ---- embedding: only on the first layer step ------------------------
    @pl.when(layer == 0)
    def _():
        xb = x_ref[...].astype(jnp.bfloat16)
        h_ref[...] = (
            jnp.dot(xb, emb_w_ref[...], preferred_element_type=jnp.float32)
            + emb_b_ref[...]
        )

    h = h_ref[...]                                   # (N, H) f32
    h_bf = h.astype(jnp.bfloat16)

    # ---- self-attention --------------------------------------------------
    # Fused q|k|v projection: one wide MXU pass; the 1/sqrt(d) scale is
    # already folded into the q columns of wqkv / bqkv.
    qkv = (jnp.dot(h_bf, wqkv_ref[0], preferred_element_type=jnp.float32)
           + bqkv_ref[0])                            # (N, 3H)

    # (N, H) -> (Bt, S, H): leading-dim split only (no transpose).
    q3 = qkv[:, 0 * H:1 * H].reshape(Bt, S, H)
    k3 = qkv[:, 1 * H:2 * H].reshape(Bt, S, H)
    v3 = qkv[:, 2 * H:3 * H].reshape(Bt, S, H)

    # Per-head, batch-batched SDPA.  Static head loop: O(num_heads) lane
    # slices total (independent of Bt), single batched einsum pair per head.
    ctx = []
    for hh in range(num_heads):
        cols = slice(hh * d, (hh + 1) * d)
        qh = q3[:, :, cols].astype(jnp.bfloat16)     # (Bt, S, d)
        kh = k3[:, :, cols].astype(jnp.bfloat16)
        vh = v3[:, :, cols].astype(jnp.bfloat16)
        s = jnp.einsum("bqd,bkd->bqk", qh, kh,
                       preferred_element_type=jnp.float32)   # (Bt, S, S)
        s = s - jnp.max(s, axis=-1, keepdims=True)
        p = jnp.exp(s)
        p = p * pl.reciprocal(jnp.sum(p, axis=-1, keepdims=True), approx=True)
        ctx.append(jnp.einsum("bqk,bkd->bqd", p.astype(jnp.bfloat16), vh,
                              preferred_element_type=jnp.float32))
    # TODO(synk): for long sequences convert this to an online-softmax
    # (flash) loop over K tiles so the (Bt, S, S) scores never materialize.

    attn = jnp.concatenate(ctx, axis=-1).reshape(N, H)        # (Bt,S,H)->(N,H)
    attn = (jnp.dot(attn.astype(jnp.bfloat16), wo_ref[0],
                    preferred_element_type=jnp.float32) + bo_ref[0])

    y = _layer_norm(h + attn, g1_ref[0], be1_ref[0])           # post-norm 1

    # ---- feed forward, row-chunked so the f32 (rows, 4H) intermediate is
    # bounded by ffn_row_chunk regardless of Bt*S (keeps v7x inside 64 MiB) --
    for r0 in range(0, N, ffn_row_chunk):
        r = min(ffn_row_chunk, N - r0)
        yc = y[r0:r0 + r]
        f = (jnp.dot(yc.astype(jnp.bfloat16), w1_ref[0],
                     preferred_element_type=jnp.float32) + b1_ref[0])
        f = jnp.maximum(f, 0.0)                                # relu
        f = (jnp.dot(f.astype(jnp.bfloat16), w2_ref[0],
                     preferred_element_type=jnp.float32) + b2_ref[0])
        h_ref[r0:r0 + r, :] = _layer_norm(yc + f, g2_ref[0], be2_ref[0])

    # ---- last-token hidden state, only after the last layer --------------
    @pl.when(layer == num_layers - 1)
    def _():
        # One strided sublane load: rows S-1, 2S-1, ... (one per batch elem).
        out_ref[...] = h_ref[pl.ds(S - 1, Bt, stride=S), :]


# ----------------------------------------------------------------------------
# Wrapper: one pallas_call for embedding + encoder; tiny fc_out runs in XLA.
# ----------------------------------------------------------------------------
def _pick_batch_block(batch):
    # >= 2 row blocks on the "parallel" batch axis feed both of v7x's
    # TensorCores, but keep the per-block batch a multiple of 8 so the
    # (Bt, H) output block stays sublane-aligned.  Tiny batches => 1 block.
    half = batch // 2
    if batch % 2 == 0 and half % 8 == 0:
        return half
    return batch


def _vmem_limit_bytes():
    # v7x has 64 MiB/TC -> leave ~16 MiB headroom for compiler scratch;
    # on 128 MiB parts (v5e/v6e) allow up to 112 MiB so big-H per-layer
    # weights stay fully double-buffered.
    try:
        cap = pltpu.get_tpu_info().vmem_capacity_bytes
    except Exception:   # query unavailable -> conservative 128 MiB assumption
        cap = 128 * 1024 * 1024
    return max(32 * 1024 * 1024, min(cap - 16 * 1024 * 1024, 112 * 1024 * 1024))


def transformer_forward(params, x, num_heads):
    B, S, Fin = x.shape
    H = params["emb_w_t"].shape[1]
    L = params["wqkv_t"].shape[0]
    F4 = params["w1_t"].shape[-1]
    assert H % num_heads == 0, "hidden_size must be divisible by num_heads"

    Bt = _pick_batch_block(B)
    assert B % Bt == 0
    grid = (B // Bt, L)

    x2d = x.reshape(B * S, Fin)         # flatten (B, S) -> rows outside the kernel

    def layer_spec(full_shape):         # stacked per-layer tensor, streamed over l
        return pl.BlockSpec((1,) + tuple(full_shape[1:]), lambda b, l: (l, 0, 0))

    def const_spec(full_shape):         # weights shared by every grid step
        # NOTE: for very large H on v7x, single-buffer these constant-index
        # blocks (pipeline_mode=pl.Buffered(1)) to reclaim the wasted second
        # buffer; kept at the default here.
        return pl.BlockSpec(tuple(full_shape), lambda b, l: (0, 0))

    in_specs = [
        pl.BlockSpec((Bt * S, Fin), lambda b, l: (b, 0)),          # x (rows)
        const_spec((Fin, H)), const_spec((1, H)),                  # embedding
        layer_spec((L, H, 3 * H)), layer_spec((L, 1, 3 * H)),      # fused qkv
        layer_spec((L, H, H)), layer_spec((L, 1, H)),              # out proj
        layer_spec((L, 1, H)), layer_spec((L, 1, H)),              # norm1 g, b
        layer_spec((L, H, F4)), layer_spec((L, 1, F4)),            # linear1
        layer_spec((L, F4, H)), layer_spec((L, 1, H)),             # linear2
        layer_spec((L, 1, H)), layer_spec((L, 1, H)),              # norm2 g, b
    ]
    out_specs = pl.BlockSpec((Bt, H), lambda b, l: (b, 0))

    kern = functools.partial(
        _fused_transformer_kernel,
        num_heads=num_heads, seq_len=S,
        ffn_row_chunk=min(Bt * S, 512))

    last_h = pl.pallas_call(
        kern,
        out_shape=jax.ShapeDtypeStruct((B, H), jnp.float32),
        grid=grid,
        in_specs=in_specs,
        out_specs=out_specs,
        scratch_shapes=[pltpu.VMEM((Bt * S, H), jnp.float32)],
        compiler_params=pltpu.CompilerParams(
            dimension_semantics=("parallel", "arbitrary"),
            vmem_limit_bytes=_vmem_limit_bytes(),
        ),
    )(
        x2d,
        params["emb_w_t"], params["emb_b"],
        params["wqkv_t"], params["bqkv"],
        params["wo_t"], params["bo"],
        params["g1"], params["be1"],
        params["w1_t"], params["b1"],
        params["w2_t"], params["b2"],
        params["g2"], params["be2"],
    )

    # Final fc_out on the last token, outside the kernel: the kernel output
    # stays lane-dense (B, H) and this (B,H)@(H,O) matmul is tiny in XLA.
    out = jnp.dot(last_h, params["fc_w_t"]) + params["fc_b"]
    return out, None                    # matches (output, None)


# ----------------------------------------------------------------------------
# Parameter init (deterministic, PyTorch-like shapes), pre-transposed / stacked
# per layer, matmul weights pre-cast to bf16 (f32 accumulation in-kernel).
# ----------------------------------------------------------------------------
def _lin_init(key, out_f, in_f):
    k1, k2 = jax.random.split(key)
    bound = 1.0 / math.sqrt(in_f)
    w = jax.random.uniform(k1, (out_f, in_f), jnp.float32, -bound, bound)
    b = jax.random.uniform(k2, (out_f,), jnp.float32, -bound, bound)
    return w, b


def init_params(key, input_size, num_heads, hidden_size, num_layers, output_size):
    H, F4 = hidden_size, 4 * hidden_size
    d = H // num_heads
    scale = 1.0 / math.sqrt(d)
    keys = jax.random.split(key, 2 + num_layers)

    emb_w, emb_b = _lin_init(keys[0], H, input_size)
    fc_w, fc_b = _lin_init(keys[1], output_size, H)

    names = ("wqkv_t", "bqkv", "wo_t", "bo", "g1", "be1",
             "w1_t", "b1", "w2_t", "b2", "g2", "be2")
    per_layer = {n: [] for n in names}
    for li in range(num_layers):
        lk = jax.random.split(keys[2 + li], 4)
        wqkv, bqkv = _lin_init(lk[0], 3 * H, H)      # attention in_proj
        wo, bo = _lin_init(lk[1], H, H)              # attention out_proj
        w1, b1 = _lin_init(lk[2], F4, H)             # linear1
        w2, b2 = _lin_init(lk[3], H, F4)             # linear2
        wq, wk, wv = wqkv[:H], wqkv[H:2 * H], wqkv[2 * H:]
        bq, bk, bv = bqkv[:H], bqkv[H:2 * H], bqkv[2 * H:]
        # Fused q|k|v weight with the 1/sqrt(head_dim) attention scale folded
        # into the q columns (zero runtime cost).
        per_layer["wqkv_t"].append(
            jnp.concatenate([(wq * scale).T, wk.T, wv.T], axis=1))   # (H, 3H)
        per_layer["bqkv"].append(
            jnp.concatenate([bq * scale, bk, bv]).reshape(1, 3 * H))
        per_layer["wo_t"].append(wo.T)
        per_layer["bo"].append(bo.reshape(1, H))
        per_layer["g1"].append(jnp.ones((1, H), jnp.float32))
        per_layer["be1"].append(jnp.zeros((1, H), jnp.float32))
        per_layer["w1_t"].append(w1.T)
        per_layer["b1"].append(b1.reshape(1, F4))
        per_layer["w2_t"].append(w2.T)
        per_layer["b2"].append(b2.reshape(1, H))
        per_layer["g2"].append(jnp.ones((1, H), jnp.float32))
        per_layer["be2"].append(jnp.zeros((1, H), jnp.float32))

    params = {n: jnp.stack(v, axis=0) for n, v in per_layer.items()}
    # bf16 MXU operands (f32 accumulation in-kernel).
    # TODO(synk): on v7x the FFN weights w1_t/w2_t could be fp8 with
    # per-channel scales (halves weight DMA/VMEM, up to ~2x MXU) if the
    # accuracy budget allows.
    for n in ("wqkv_t", "wo_t", "w1_t", "w2_t"):
        params[n] = params[n].astype(jnp.bfloat16)

    params["emb_w_t"] = emb_w.T.astype(jnp.bfloat16)
    params["emb_b"] = emb_b.reshape(1, H)
    # fc_out is applied outside the kernel -> keep full f32.
    params["fc_w_t"] = fc_w.T
    params["fc_b"] = fc_b.reshape(1, output_size)
    return params


if __name__ == "__main__":
    # Small shapes consistent with the module: (batch, seq, input_size)
    B, S = 2, 8
    input_size, num_heads, hidden_size, num_layers, output_size = 8, 4, 32, 2, 1

    key = jax.random.PRNGKey(0)
    kx, kp = jax.random.split(key)
    x = jax.random.normal(kx, (B, S, input_size), jnp.float32)
    params = init_params(kp, input_size, num_heads, hidden_size, num_layers,
                         output_size)

    out, aux = transformer_forward(params, x, num_heads)
    jax.block_until_ready(out)
    assert out.shape == (B, output_size) and aux is None
    # TODO(synk): dropout is eval-mode identity here; training-mode dropout RNG
    # would need pltpu.prng_* and is intentionally omitted.
    print("KERNEL_OK")
</pallas_src>

<mosaic_0001>
module attributes {stable_mosaic.version = 11 : i64} {
  func.func @_fused_transformer_kernel(%arg0: i32, %arg1: i32, %arg2: memref<16x8xf32, #tpu.memory_space<vmem>>, %arg3: memref<8x32xbf16, #tpu.memory_space<vmem>>, %arg4: memref<1x32xf32, #tpu.memory_space<vmem>>, %arg5: memref<1x32x96xbf16, #tpu.memory_space<vmem>>, %arg6: memref<1x1x96xf32, #tpu.memory_space<vmem>>, %arg7: memref<1x32x32xbf16, #tpu.memory_space<vmem>>, %arg8: memref<1x1x32xf32, #tpu.memory_space<vmem>>, %arg9: memref<1x1x32xf32, #tpu.memory_space<vmem>>, %arg10: memref<1x1x32xf32, #tpu.memory_space<vmem>>, %arg11: memref<1x32x128xbf16, #tpu.memory_space<vmem>>, %arg12: memref<1x1x128xf32, #tpu.memory_space<vmem>>, %arg13: memref<1x128x32xbf16, #tpu.memory_space<vmem>>, %arg14: memref<1x1x32xf32, #tpu.memory_space<vmem>>, %arg15: memref<1x1x32xf32, #tpu.memory_space<vmem>>, %arg16: memref<1x1x32xf32, #tpu.memory_space<vmem>>, %arg17: memref<2x32xf32, #tpu.memory_space<vmem>>, %arg18: memref<16x32xf32, #tpu.memory_space<vmem>>) attributes {dimension_semantics = [#tpu.dimension_semantics<parallel>, #tpu.dimension_semantics<arbitrary>], iteration_bounds = array<i64: 1, 2>, scalar_prefetch = 0 : i64, scratch_operands = 1 : i64, tpu.core_type = #tpu.core_type<tc>, window_params = [{transform_indices = @transform_0, window_bounds = array<i64: 16, 8>}, {pipeline_mode = #tpu.pipeline_mode<synchronous>, transform_indices = @transform_1, window_bounds = array<i64: 8, 32>}, {pipeline_mode = #tpu.pipeline_mode<synchronous>, transform_indices = @transform_2, window_bounds = array<i64: 1, 32>}, {transform_indices = @transform_3, window_bounds = array<i64: 1, 32, 96>}, {transform_indices = @transform_4, window_bounds = array<i64: 1, 1, 96>}, {transform_indices = @transform_5, window_bounds = array<i64: 1, 32, 32>}, {transform_indices = @transform_6, window_bounds = array<i64: 1, 1, 32>}, {transform_indices = @transform_7, window_bounds = array<i64: 1, 1, 32>}, {transform_indices = @transform_8, window_bounds = array<i64: 1, 1, 32>}, {transform_indices = @transform_9, window_bounds = array<i64: 1, 32, 128>}, {transform_indices = @transform_10, window_bounds = array<i64: 1, 1, 128>}, {transform_indices = @transform_11, window_bounds = array<i64: 1, 128, 32>}, {transform_indices = @transform_12, window_bounds = array<i64: 1, 1, 32>}, {transform_indices = @transform_13, window_bounds = array<i64: 1, 1, 32>}, {transform_indices = @transform_14, window_bounds = array<i64: 1, 1, 32>}, {transform_indices = @transform_15, window_bounds = array<i64: 2, 32>}]} {
    %c0_i32 = arith.constant 0 : i32
    %0 = arith.cmpi eq, %arg1, %c0_i32 : i32
    %1 = arith.extui %0 : i1 to i32
    %c0_i32_0 = arith.constant 0 : i32
    %2 = arith.cmpi ne, %1, %c0_i32_0 : i32
    scf.if %2 {
      %c0_71 = arith.constant 0 : index
      %c0_72 = arith.constant 0 : index
      %180 = vector.load %arg2[%c0_71, %c0_72] : memref<16x8xf32, #tpu.memory_space<vmem>>, vector<16x8xf32>
      %181 = arith.truncf %180 : vector<16x8xf32> to vector<16x8xbf16>
      %c0_73 = arith.constant 0 : index
      %c0_74 = arith.constant 0 : index
      %182 = vector.load %arg3[%c0_73, %c0_74] : memref<8x32xbf16, #tpu.memory_space<vmem>>, vector<8x32xbf16>
      %cst_75 = arith.constant dense<0.000000e+00> : vector<16x32xf32>
      %183 = tpu.matmul %181, %182, %cst_75 {dimension_numbers = #tpu.dot_dimension_numbers<[1], [0], [0], [1], [0, 0, 1, 1], [], []>} : vector<16x8xbf16>, vector<8x32xbf16>, vector<16x32xf32> -> vector<16x32xf32>
      %c0_76 = arith.constant 0 : index
      %c0_77 = arith.constant 0 : index
      %184 = vector.load %arg4[%c0_76, %c0_77] : memref<1x32xf32, #tpu.memory_space<vmem>>, vector<1x32xf32>
      %185 = vector.broadcast %184 : vector<1x32xf32> to vector<16x32xf32>
      %186 = arith.addf %183, %185 : vector<16x32xf32>
      %c0_78 = arith.constant 0 : index
      %c0_79 = arith.constant 0 : index
      %187 = vector.load %arg18[%c0_78, %c0_79] : memref<16x32xf32, #tpu.memory_space<vmem>>, vector<16x32xf32>
      tpu.vector_store %arg18[%c0_78, %c0_79], %186 {strides = array<i32>} : memref<16x32xf32, #tpu.memory_space<vmem>>, vector<16x32xf32>,
    } else {
    }
    %c0 = arith.constant 0 : index
    %c0_1 = arith.constant 0 : index
    %3 = vector.load %arg18[%c0, %c0_1] : memref<16x32xf32, #tpu.memory_space<vmem>>, vector<16x32xf32>
    %4 = arith.truncf %3 : vector<16x32xf32> to vector<16x32xbf16>
    %c0_2 = arith.constant 0 : index
    %c0_3 = arith.constant 0 : index
    %c0_4 = arith.constant 0 : index
    %5 = vector.load %arg5[%c0_2, %c0_3, %c0_4] : memref<1x32x96xbf16, #tpu.memory_space<vmem>>, vector<1x32x96xbf16>
    %6 = vector.shape_cast %5 : vector<1x32x96xbf16> to vector<32x96xbf16>
    %cst = arith.constant dense<0.000000e+00> : vector<16x96xf32>
    %7 = tpu.matmul %4, %6, %cst {dimension_numbers = #tpu.dot_dimension_numbers<[1], [0], [0], [1], [0, 0, 1, 1], [], []>} : vector<16x32xbf16>, vector<32x96xbf16>, vector<16x96xf32> -> vector<16x96xf32>
    %c0_5 = arith.constant 0 : index
    %c0_6 = arith.constant 0 : index
    %c0_7 = arith.constant 0 : index
    %8 = vector.load %arg6[%c0_5, %c0_6, %c0_7] : memref<1x1x96xf32, #tpu.memory_space<vmem>>, vector<1x1x96xf32>
    %9 = vector.shape_cast %8 : vector<1x1x96xf32> to vector<1x96xf32>
    %10 = vector.broadcast %9 : vector<1x96xf32> to vector<16x96xf32>
    %11 = arith.addf %7, %10 : vector<16x96xf32>
    %12 = vector.extract_strided_slice %11 {offsets = [0, 0], sizes = [16, 32], strides = [1, 1]} : vector<16x96xf32> to vector<16x32xf32>
    %13 = vector.shape_cast %12 : vector<16x32xf32> to vector<2x8x32xf32>
    %14 = vector.extract_strided_slice %11 {offsets = [0, 32], sizes = [16, 32], strides = [1, 1]} : vector<16x96xf32> to vector<16x32xf32>
    %15 = vector.shape_cast %14 : vector<16x32xf32> to vector<2x8x32xf32>
    %16 = vector.extract_strided_slice %11 {offsets = [0, 64], sizes = [16, 32], strides = [1, 1]} : vector<16x96xf32> to vector<16x32xf32>
    %17 = vector.shape_cast %16 : vector<16x32xf32> to vector<2x8x32xf32>
    %18 = vector.extract_strided_slice %13 {offsets = [0, 0, 0], sizes = [2, 8, 8], strides = [1, 1, 1]} : vector<2x8x32xf32> to vector<2x8x8xf32>
    %19 = arith.truncf %18 : vector<2x8x8xf32> to vector<2x8x8xbf16>
    %20 = vector.extract_strided_slice %15 {offsets = [0, 0, 0], sizes = [2, 8, 8], strides = [1, 1, 1]} : vector<2x8x32xf32> to vector<2x8x8xf32>
    %21 = arith.truncf %20 : vector<2x8x8xf32> to vector<2x8x8xbf16>
    %22 = vector.extract_strided_slice %17 {offsets = [0, 0, 0], sizes = [2, 8, 8], strides = [1, 1, 1]} : vector<2x8x32xf32> to vector<2x8x8xf32>
    %23 = arith.truncf %22 : vector<2x8x8xf32> to vector<2x8x8xbf16>
    "tpu.trace_start"() <{level = 10 : i32, message = "bqd,bkd->bqk"}> : () -> ()
    %cst_8 = arith.constant dense<0.000000e+00> : vector<2x8x8xf32>
    %24 = tpu.matmul %19, %21, %cst_8 {dimension_numbers = #tpu.dot_dimension_numbers<[2], [2], [1], [1], [0, 0, 0, 1, 1, 1], [0], [0]>} : vector<2x8x8xbf16>, vector<2x8x8xbf16>, vector<2x8x8xf32> -> vector<2x8x8xf32>
    "tpu.trace_stop"() : () -> ()
    %cst_9 = arith.constant dense<0xFF800000> : vector<2x8xf32>
    %25 = vector.multi_reduction <maximumf>, %24, %cst_9 [2] : vector<2x8x8xf32> to vector<2x8xf32>
    %26 = vector.shape_cast %25 : vector<2x8xf32> to vector<2x8x1xf32>
    %27 = vector.broadcast %26 : vector<2x8x1xf32> to vector<2x8x8xf32>
    %28 = arith.subf %24, %27 : vector<2x8x8xf32>
    %29 = math.exp %28 : vector<2x8x8xf32>
    %cst_10 = arith.constant dense<0.000000e+00> : vector<2x8xf32>
    %30 = vector.multi_reduction <add>, %29, %cst_10 [2] : vector<2x8x8xf32> to vector<2x8xf32>
    %31 = vector.shape_cast %30 : vector<2x8xf32> to vector<2x8x1xf32>
    %32 = tpu.reciprocal %31 {approx = true} : vector<2x8x1xf32> -> vector<2x8x1xf32>
    %33 = vector.broadcast %32 : vector<2x8x1xf32> to vector<2x8x8xf32>
    %34 = arith.mulf %29, %33 : vector<2x8x8xf32>
    %35 = arith.truncf %34 : vector<2x8x8xf32> to vector<2x8x8xbf16>
    "tpu.trace_start"() <{level = 10 : i32, message = "bqk,bkd->bqd"}> : () -> ()
    %cst_11 = arith.constant dense<0.000000e+00> : vector<2x8x8xf32>
    %36 = tpu.matmul %35, %23, %cst_11 {dimension_numbers = #tpu.dot_dimension_numbers<[2], [1], [1], [2], [0, 0, 0, 1, 1, 2], [0], [0]>} : vector<2x8x8xbf16>, vector<2x8x8xbf16>, vector<2x8x8xf32> -> vector<2x8x8xf32>
    "tpu.trace_stop"() : () -> ()
    %37 = vector.extract_strided_slice %13 {offsets = [0, 0, 8], sizes = [2, 8, 8], strides = [1, 1, 1]} : vector<2x8x32xf32> to vector<2x8x8xf32>
    %38 = arith.truncf %37 : vector<2x8x8xf32> to vector<2x8x8xbf16>
    %39 = vector.extract_strided_slice %15 {offsets = [0, 0, 8], sizes = [2, 8, 8], strides = [1, 1, 1]} : vector<2x8x32xf32> to vector<2x8x8xf32>
    %40 = arith.truncf %39 : vector<2x8x8xf32> to vector<2x8x8xbf16>
    %41 = vector.extract_strided_slice %17 {offsets = [0, 0, 8], sizes = [2, 8, 8], strides = [1, 1, 1]} : vector<2x8x32xf32> to vector<2x8x8xf32>
    %42 = arith.truncf %41 : vector<2x8x8xf32> to vector<2x8x8xbf16>
    "tpu.trace_start"() <{level = 10 : i32, message = "bqd,bkd->bqk"}> : () -> ()
    %cst_12 = arith.constant dense<0.000000e+00> : vector<2x8x8xf32>
    %43 = tpu.matmul %38, %40, %cst_12 {dimension_numbers = #tpu.dot_dimension_numbers<[2], [2], [1], [1], [0, 0, 0, 1, 1, 1], [0], [0]>} : vector<2x8x8xbf16>, vector<2x8x8xbf16>, vector<2x8x8xf32> -> vector<2x8x8xf32>
    "tpu.trace_stop"() : () -> ()
    %cst_13 = arith.constant dense<0xFF800000> : vector<2x8xf32>
    %44 = vector.multi_reduction <maximumf>, %43, %cst_13 [2] : vector<2x8x8xf32> to vector<2x8xf32>
    %45 = vector.shape_cast %44 : vector<2x8xf32> to vector<2x8x1xf32>
    %46 = vector.broadcast %45 : vector<2x8x1xf32> to vector<2x8x8xf32>
    %47 = arith.subf %43, %46 : vector<2x8x8xf32>
    %48 = math.exp %47 : vector<2x8x8xf32>
    %cst_14 = arith.constant dense<0.000000e+00> : vector<2x8xf32>
    %49 = vector.multi_reduction <add>, %48, %cst_14 [2] : vector<2x8x8xf32> to vector<2x8xf32>
    %50 = vector.shape_cast %49 : vector<2x8xf32> to vector<2x8x1xf32>
    %51 = tpu.reciprocal %50 {approx = true} : vector<2x8x1xf32> -> vector<2x8x1xf32>
    %52 = vector.broadcast %51 : vector<2x8x1xf32> to vector<2x8x8xf32>
    %53 = arith.mulf %48, %52 : vector<2x8x8xf32>
    %54 = arith.truncf %53 : vector<2x8x8xf32> to vector<2x8x8xbf16>
    "tpu.trace_start"() <{level = 10 : i32, message = "bqk,bkd->bqd"}> : () -> ()
    %cst_15 = arith.constant dense<0.000000e+00> : vector<2x8x8xf32>
    %55 = tpu.matmul %54, %42, %cst_15 {dimension_numbers = #tpu.dot_dimension_numbers<[2], [1], [1], [2], [0, 0, 0, 1, 1, 2], [0], [0]>} : vector<2x8x8xbf16>, vector<2x8x8xbf16>, vector<2x8x8xf32> -> vector<2x8x8xf32>
    "tpu.trace_stop"() : () -> ()
    %56 = vector.extract_strided_slice %13 {offsets = [0, 0, 16], sizes = [2, 8, 8], strides = [1, 1, 1]} : vector<2x8x32xf32> to vector<2x8x8xf32>
    %57 = arith.truncf %56 : vector<2x8x8xf32> to vector<2x8x8xbf16>
    %58 = vector.extract_strided_slice %15 {offsets = [0, 0, 16], sizes = [2, 8, 8], strides = [1, 1, 1]} : vector<2x8x32xf32> to vector<2x8x8xf32>
    %59 = arith.truncf %58 : vector<2x8x8xf32> to vector<2x8x8xbf16>
    %60 = vector.extract_strided_slice %17 {offsets = [0, 0, 16], sizes = [2, 8, 8], strides = [1, 1, 1]} : vector<2x8x32xf32> to vector<2x8x8xf32>
    %61 = arith.truncf %60 : vector<2x8x8xf32> to vector<2x8x8xbf16>
    "tpu.trace_start"() <{level = 10 : i32, message = "bqd,bkd->bqk"}> : () -> ()
    %cst_16 = arith.constant dense<0.000000e+00> : vector<2x8x8xf32>
    %62 = tpu.matmul %57, %59, %cst_16 {dimension_numbers = #tpu.dot_dimension_numbers<[2], [2], [1], [1], [0, 0, 0, 1, 1, 1], [0], [0]>} : vector<2x8x8xbf16>, vector<2x8x8xbf16>, vector<2x8x8xf32> -> vector<2x8x8xf32>
    "tpu.trace_stop"() : () -> ()
    %cst_17 = arith.constant dense<0xFF800000> : vector<2x8xf32>
    %63 = vector.multi_reduction <maximumf>, %62, %cst_17 [2] : vector<2x8x8xf32> to vector<2x8xf32>
    %64 = vector.shape_cast %63 : vector<2x8xf32> to vector<2x8x1xf32>
    %65 = vector.broadcast %64 : vector<2x8x1xf32> to vector<2x8x8xf32>
    %66 = arith.subf %62, %65 : vector<2x8x8xf32>
    %67 = math.exp %66 : vector<2x8x8xf32>
    %cst_18 = arith.constant dense<0.000000e+00> : vector<2x8xf32>
    %68 = vector.multi_reduction <add>, %67, %cst_18 [2] : vector<2x8x8xf32> to vector<2x8xf32>
    %69 = vector.shape_cast %68 : vector<2x8xf32> to vector<2x8x1xf32>
    %70 = tpu.reciprocal %69 {approx = true} : vector<2x8x1xf32> -> vector<2x8x1xf32>
    %71 = vector.broadcast %70 : vector<2x8x1xf32> to vector<2x8x8xf32>
    %72 = arith.mulf %67, %71 : vector<2x8x8xf32>
    %73 = arith.truncf %72 : vector<2x8x8xf32> to vector<2x8x8xbf16>
    "tpu.trace_start"() <{level = 10 : i32, message = "bqk,bkd->bqd"}> : () -> ()
    %cst_19 = arith.constant dense<0.000000e+00> : vector<2x8x8xf32>
    %74 = tpu.matmul %73, %61, %cst_19 {dimension_numbers = #tpu.dot_dimension_numbers<[2], [1], [1], [2], [0, 0, 0, 1, 1, 2], [0], [0]>} : vector<2x8x8xbf16>, vector<2x8x8xbf16>, vector<2x8x8xf32> -> vector<2x8x8xf32>
    "tpu.trace_stop"() : () -> ()
    %75 = vector.extract_strided_slice %13 {offsets = [0, 0, 24], sizes = [2, 8, 8], strides = [1, 1, 1]} : vector<2x8x32xf32> to vector<2x8x8xf32>
    %76 = arith.truncf %75 : vector<2x8x8xf32> to vector<2x8x8xbf16>
    %77 = vector.extract_strided_slice %15 {offsets = [0, 0, 24], sizes = [2, 8, 8], strides = [1, 1, 1]} : vector<2x8x32xf32> to vector<2x8x8xf32>
    %78 = arith.truncf %77 : vector<2x8x8xf32> to vector<2x8x8xbf16>
    %79 = vector.extract_strided_slice %17 {offsets = [0, 0, 24], sizes = [2, 8, 8], strides = [1, 1, 1]} : vector<2x8x32xf32> to vector<2x8x8xf32>
    %80 = arith.truncf %79 : vector<2x8x8xf32> to vector<2x8x8xbf16>
    "tpu.trace_start"() <{level = 10 : i32, message = "bqd,bkd->bqk"}> : () -> ()
    %cst_20 = arith.constant dense<0.000000e+00> : vector<2x8x8xf32>
    %81 = tpu.matmul %76, %78, %cst_20 {dimension_numbers = #tpu.dot_dimension_numbers<[2], [2], [1], [1], [0, 0, 0, 1, 1, 1], [0], [0]>} : vector<2x8x8xbf16>, vector<2x8x8xbf16>, vector<2x8x8xf32> -> vector<2x8x8xf32>
    "tpu.trace_stop"() : () -> ()
    %cst_21 = arith.constant dense<0xFF800000> : vector<2x8xf32>
    %82 = vector.multi_reduction <maximumf>, %81, %cst_21 [2] : vector<2x8x8xf32> to vector<2x8xf32>
    %83 = vector.shape_cast %82 : vector<2x8xf32> to vector<2x8x1xf32>
    %84 = vector.broadcast %83 : vector<2x8x1xf32> to vector<2x8x8xf32>
    %85 = arith.subf %81, %84 : vector<2x8x8xf32>
    %86 = math.exp %85 : vector<2x8x8xf32>
    %cst_22 = arith.constant dense<0.000000e+00> : vector<2x8xf32>
    %87 = vector.multi_reduction <add>, %86, %cst_22 [2] : vector<2x8x8xf32> to vector<2x8xf32>
    %88 = vector.shape_cast %87 : vector<2x8xf32> to vector<2x8x1xf32>
    %89 = tpu.reciprocal %88 {approx = true} : vector<2x8x1xf32> -> vector<2x8x1xf32>
    %90 = vector.broadcast %89 : vector<2x8x1xf32> to vector<2x8x8xf32>
    %91 = arith.mulf %86, %90 : vector<2x8x8xf32>
    %92 = arith.truncf %91 : vector<2x8x8xf32> to vector<2x8x8xbf16>
    "tpu.trace_start"() <{level = 10 : i32, message = "bqk,bkd->bqd"}> : () -> ()
    %cst_23 = arith.constant dense<0.000000e+00> : vector<2x8x8xf32>
    %93 = tpu.matmul %92, %80, %cst_23 {dimension_numbers = #tpu.dot_dimension_numbers<[2], [1], [1], [2], [0, 0, 0, 1, 1, 2], [0], [0]>} : vector<2x8x8xbf16>, vector<2x8x8xbf16>, vector<2x8x8xf32> -> vector<2x8x8xf32>
    "tpu.trace_stop"() : () -> ()
    %94 = tpu.concatenate %36, %55, %74, %93 in 2 : vector<2x8x8xf32>, vector<2x8x8xf32>, vector<2x8x8xf32>, vector<2x8x8xf32> -> vector<2x8x32xf32>
    %95 = vector.shape_cast %94 : vector<2x8x32xf32> to vector<16x32xf32>
    %96 = arith.truncf %95 : vector<16x32xf32> to vector<16x32xbf16>
    %c0_24 = arith.constant 0 : index
    %c0_25 = arith.constant 0 : index
    %c0_26 = arith.constant 0 : index
    %97 = vector.load %arg7[%c0_24, %c0_25, %c0_26] : memref<1x32x32xbf16, #tpu.memory_space<vmem>>, vector<1x32x32xbf16>
    %98 = vector.shape_cast %97 : vector<1x32x32xbf16> to vector<32x32xbf16>
    %cst_27 = arith.constant dense<0.000000e+00> : vector<16x32xf32>
    %99 = tpu.matmul %96, %98, %cst_27 {dimension_numbers = #tpu.dot_dimension_numbers<[1], [0], [0], [1], [0, 0, 1, 1], [], []>} : vector<16x32xbf16>, vector<32x32xbf16>, vector<16x32xf32> -> vector<16x32xf32>
    %c0_28 = arith.constant 0 : index
    %c0_29 = arith.constant 0 : index
    %c0_30 = arith.constant 0 : index
    %100 = vector.load %arg8[%c0_28, %c0_29, %c0_30] : memref<1x1x32xf32, #tpu.memory_space<vmem>>, vector<1x1x32xf32>
    %101 = vector.shape_cast %100 : vector<1x1x32xf32> to vector<1x32xf32>
    %102 = vector.broadcast %101 : vector<1x32xf32> to vector<16x32xf32>
    %103 = arith.addf %99, %102 : vector<16x32xf32>
    %104 = arith.addf %3, %103 : vector<16x32xf32>
    %c0_31 = arith.constant 0 : index
    %c0_32 = arith.constant 0 : index
    %c0_33 = arith.constant 0 : index
    %105 = vector.load %arg9[%c0_31, %c0_32, %c0_33] : memref<1x1x32xf32, #tpu.memory_space<vmem>>, vector<1x1x32xf32>
    %106 = vector.shape_cast %105 : vector<1x1x32xf32> to vector<1x32xf32>
    %c0_34 = arith.constant 0 : index
    %c0_35 = arith.constant 0 : index
    %c0_36 = arith.constant 0 : index
    %107 = vector.load %arg10[%c0_34, %c0_35, %c0_36] : memref<1x1x32xf32, #tpu.memory_space<vmem>>, vector<1x1x32xf32>
    %108 = vector.shape_cast %107 : vector<1x1x32xf32> to vector<1x32xf32>
    %cst_37 = arith.constant dense<0.000000e+00> : vector<16xf32>
    %109 = vector.multi_reduction <add>, %104, %cst_37 [1] : vector<16x32xf32> to vector<16xf32>
    %110 = vector.shape_cast %109 : vector<16xf32> to vector<16x1xf32>
    %cst_38 = arith.constant 3.200000e+01 : f32
    %111 = vector.broadcast %cst_38 : f32 to vector<16x1xf32>
    %112 = arith.divf %110, %111 : vector<16x1xf32>
    %113 = vector.broadcast %112 : vector<16x1xf32> to vector<16x32xf32>
    %114 = arith.subf %104, %113 : vector<16x32xf32>
    %115 = arith.mulf %114, %114 : vector<16x32xf32>
    %cst_39 = arith.constant dense<0.000000e+00> : vector<16xf32>
    %116 = vector.multi_reduction <add>, %115, %cst_39 [1] : vector<16x32xf32> to vector<16xf32>
    %117 = vector.shape_cast %116 : vector<16xf32> to vector<16x1xf32>
    %cst_40 = arith.constant 3.200000e+01 : f32
    %118 = vector.broadcast %cst_40 : f32 to vector<16x1xf32>
    %119 = arith.divf %117, %118 : vector<16x1xf32>
    %120 = vector.broadcast %112 : vector<16x1xf32> to vector<16x32xf32>
    %121 = arith.subf %104, %120 : vector<16x32xf32>
    %cst_41 = arith.constant 9.99999974E-6 : f32
    %122 = vector.broadcast %cst_41 : f32 to vector<16x1xf32>
    %123 = arith.addf %119, %122 : vector<16x1xf32>
    %124 = math.rsqrt %123 : vector<16x1xf32>
    %125 = vector.broadcast %124 : vector<16x1xf32> to vector<16x32xf32>
    %126 = arith.mulf %121, %125 : vector<16x32xf32>
    %127 = vector.broadcast %106 : vector<1x32xf32> to vector<16x32xf32>
    %128 = arith.mulf %126, %127 : vector<16x32xf32>
    %129 = vector.broadcast %108 : vector<1x32xf32> to vector<16x32xf32>
    %130 = arith.addf %128, %129 : vector<16x32xf32>
    %131 = arith.truncf %130 : vector<16x32xf32> to vector<16x32xbf16>
    %c0_42 = arith.constant 0 : index
    %c0_43 = arith.constant 0 : index
    %c0_44 = arith.constant 0 : index
    %132 = vector.load %arg11[%c0_42, %c0_43, %c0_44] : memref<1x32x128xbf16, #tpu.memory_space<vmem>>, vector<1x32x128xbf16>
    %133 = vector.shape_cast %132 : vector<1x32x128xbf16> to vector<32x128xbf16>
    %cst_45 = arith.constant dense<0.000000e+00> : vector<16x128xf32>
    %134 = tpu.matmul %131, %133, %cst_45 {dimension_numbers = #tpu.dot_dimension_numbers<[1], [0], [0], [1], [0, 0, 1, 1], [], []>} : vector<16x32xbf16>, vector<32x128xbf16>, vector<16x128xf32> -> vector<16x128xf32>
    %c0_46 = arith.constant 0 : index
    %c0_47 = arith.constant 0 : index
    %c0_48 = arith.constant 0 : index
    %135 = vector.load %arg12[%c0_46, %c0_47, %c0_48] : memref<1x1x128xf32, #tpu.memory_space<vmem>>, vector<1x1x128xf32>
    %136 = vector.shape_cast %135 : vector<1x1x128xf32> to vector<1x128xf32>
    %137 = vector.broadcast %136 : vector<1x128xf32> to vector<16x128xf32>
    %138 = arith.addf %134, %137 : vector<16x128xf32>
    %cst_49 = arith.constant 0.000000e+00 : f32
    %139 = vector.broadcast %cst_49 : f32 to vector<16x128xf32>
    %140 = arith.maximumf %138, %139 : vector<16x128xf32>
    %141 = arith.truncf %140 : vector<16x128xf32> to vector<16x128xbf16>
    %c0_50 = arith.constant 0 : index
    %c0_51 = arith.constant 0 : index
    %c0_52 = arith.constant 0 : index
    %142 = vector.load %arg13[%c0_50, %c0_51, %c0_52] : memref<1x128x32xbf16, #tpu.memory_space<vmem>>, vector<1x128x32xbf16>
    %143 = vector.shape_cast %142 : vector<1x128x32xbf16> to vector<128x32xbf16>
    %cst_53 = arith.constant dense<0.000000e+00> : vector<16x32xf32>
    %144 = tpu.matmul %141, %143, %cst_53 {dimension_numbers = #tpu.dot_dimension_numbers<[1], [0], [0], [1], [0, 0, 1, 1], [], []>} : vector<16x128xbf16>, vector<128x32xbf16>, vector<16x32xf32> -> vector<16x32xf32>
    %c0_54 = arith.constant 0 : index
    %c0_55 = arith.constant 0 : index
    %c0_56 = arith.constant 0 : index
    %145 = vector.load %arg14[%c0_54, %c0_55, %c0_56] : memref<1x1x32xf32, #tpu.memory_space<vmem>>, vector<1x1x32xf32>
    %146 = vector.shape_cast %145 : vector<1x1x32xf32> to vector<1x32xf32>
    %147 = vector.broadcast %146 : vector<1x32xf32> to vector<16x32xf32>
    %148 = arith.addf %144, %147 : vector<16x32xf32>
    %149 = arith.addf %130, %148 : vector<16x32xf32>
    %c0_57 = arith.constant 0 : index
    %c0_58 = arith.constant 0 : index
    %c0_59 = arith.constant 0 : index
    %150 = vector.load %arg15[%c0_57, %c0_58, %c0_59] : memref<1x1x32xf32, #tpu.memory_space<vmem>>, vector<1x1x32xf32>
    %151 = vector.shape_cast %150 : vector<1x1x32xf32> to vector<1x32xf32>
    %c0_60 = arith.constant 0 : index
    %c0_61 = arith.constant 0 : index
    %c0_62 = arith.constant 0 : index
    %152 = vector.load %arg16[%c0_60, %c0_61, %c0_62] : memref<1x1x32xf32, #tpu.memory_space<vmem>>, vector<1x1x32xf32>
    %153 = vector.shape_cast %152 : vector<1x1x32xf32> to vector<1x32xf32>
    %cst_63 = arith.constant dense<0.000000e+00> : vector<16xf32>
    %154 = vector.multi_reduction <add>, %149, %cst_63 [1] : vector<16x32xf32> to vector<16xf32>
    %155 = vector.shape_cast %154 : vector<16xf32> to vector<16x1xf32>
    %cst_64 = arith.constant 3.200000e+01 : f32
    %156 = vector.broadcast %cst_64 : f32 to vector<16x1xf32>
    %157 = arith.divf %155, %156 : vector<16x1xf32>
    %158 = vector.broadcast %157 : vector<16x1xf32> to vector<16x32xf32>
    %159 = arith.subf %149, %158 : vector<16x32xf32>
    %160 = arith.mulf %159, %159 : vector<16x32xf32>
    %cst_65 = arith.constant dense<0.000000e+00> : vector<16xf32>
    %161 = vector.multi_reduction <add>, %160, %cst_65 [1] : vector<16x32xf32> to vector<16xf32>
    %162 = vector.shape_cast %161 : vector<16xf32> to vector<16x1xf32>
    %cst_66 = arith.constant 3.200000e+01 : f32
    %163 = vector.broadcast %cst_66 : f32 to vector<16x1xf32>
    %164 = arith.divf %162, %163 : vector<16x1xf32>
    %165 = vector.broadcast %157 : vector<16x1xf32> to vector<16x32xf32>
    %166 = arith.subf %149, %165 : vector<16x32xf32>
    %cst_67 = arith.constant 9.99999974E-6 : f32
    %167 = vector.broadcast %cst_67 : f32 to vector<16x1xf32>
    %168 = arith.addf %164, %167 : vector<16x1xf32>
    %169 = math.rsqrt %168 : vector<16x1xf32>
    %170 = vector.broadcast %169 : vector<16x1xf32> to vector<16x32xf32>
    %171 = arith.mulf %166, %170 : vector<16x32xf32>
    %172 = vector.broadcast %151 : vector<1x32xf32> to vector<16x32xf32>
    %173 = arith.mulf %171, %172 : vector<16x32xf32>
    %174 = vector.broadcast %153 : vector<1x32xf32> to vector<16x32xf32>
    %175 = arith.addf %173, %174 : vector<16x32xf32>
    %c0_68 = arith.constant 0 : index
    %c0_69 = arith.constant 0 : index
    %176 = vector.load %arg18[%c0_68, %c0_69] : memref<16x32xf32, #tpu.memory_space<vmem>>, vector<16x32xf32>
    tpu.vector_store %arg18[%c0_68, %c0_69], %175 {strides = array<i32>} : memref<16x32xf32, #tpu.memory_space<vmem>>, vector<16x32xf32>,
    %c1_i32 = arith.constant 1 : i32
    %177 = arith.cmpi eq, %arg1, %c1_i32 : i32
    %178 = arith.extui %177 : i1 to i32
    %c0_i32_70 = arith.constant 0 : i32
    %179 = arith.cmpi ne, %178, %c0_i32_70 : i32
    scf.if %179 {
      %c7 = arith.constant 7 : index
      %c0_71 = arith.constant 0 : index
      %180 = tpu.strided_load %arg18[%c7, %c0_71] {strides = array<i32: 8, 1>} : memref<16x32xf32, #tpu.memory_space<vmem>>, vector<2x32xf32>
      %c0_72 = arith.constant 0 : index
      %c0_73 = arith.constant 0 : index
      %181 = vector.load %arg17[%c0_72, %c0_73] : memref<2x32xf32, #tpu.memory_space<vmem>>, vector<2x32xf32>
      tpu.vector_store %arg17[%c0_72, %c0_73], %180 {strides = array<i32>} : memref<2x32xf32, #tpu.memory_space<vmem>>, vector<2x32xf32>,
    } else {
    }
    return
  }
  func.func @transform_0(%arg0: i32, %arg1: i32) -> (i32, i32) {
    %c0_i32 = arith.constant 0 : i32
    %c0_i32_0 = arith.constant 0 : i32
    return %arg0, %c0_i32 : i32, i32
  }
  func.func @transform_1(%arg0: i32, %arg1: i32) -> (i32, i32) {
    %c0_i32 = arith.constant 0 : i32
    %c0_i32_0 = arith.constant 0 : i32
    %c0_i32_1 = arith.constant 0 : i32
    return %c0_i32, %c0_i32_0 : i32, i32
  }
  func.func @transform_2(%arg0: i32, %arg1: i32) -> (i32, i32) {
    %c0_i32 = arith.constant 0 : i32
    %c0_i32_0 = arith.constant 0 : i32
    %c0_i32_1 = arith.constant 0 : i32
    return %c0_i32, %c0_i32_0 : i32, i32
  }
  func.func @transform_3(%arg0: i32, %arg1: i32) -> (i32, i32, i32) {
    %c0_i32 = arith.constant 0 : i32
    %c0_i32_0 = arith.constant 0 : i32
    %c0_i32_1 = arith.constant 0 : i32
    return %arg1, %c0_i32, %c0_i32_0 : i32, i32, i32
  }
  func.func @transform_4(%arg0: i32, %arg1: i32) -> (i32, i32, i32) {
    %c0_i32 = arith.constant 0 : i32
    %c0_i32_0 = arith.constant 0 : i32
    %c0_i32_1 = arith.constant 0 : i32
    return %arg1, %c0_i32, %c0_i32_0 : i32, i32, i32
  }
  func.func @transform_5(%arg0: i32, %arg1: i32) -> (i32, i32, i32) {
    %c0_i32 = arith.constant 0 : i32
    %c0_i32_0 = arith.constant 0 : i32
    %c0_i32_1 = arith.constant 0 : i32
    return %arg1, %c0_i32, %c0_i32_0 : i32, i32, i32
  }
  func.func @transform_6(%arg0: i32, %arg1: i32) -> (i32, i32, i32) {
    %c0_i32 = arith.constant 0 : i32
    %c0_i32_0 = arith.constant 0 : i32
    %c0_i32_1 = arith.constant 0 : i32
    return %arg1, %c0_i32, %c0_i32_0 : i32, i32, i32
  }
  func.func @transform_7(%arg0: i32, %arg1: i32) -> (i32, i32, i32) {
    %c0_i32 = arith.constant 0 : i32
    %c0_i32_0 = arith.constant 0 : i32
    %c0_i32_1 = arith.constant 0 : i32
    return %arg1, %c0_i32, %c0_i32_0 : i32, i32, i32
  }
  func.func @transform_8(%arg0: i32, %arg1: i32) -> (i32, i32, i32) {
    %c0_i32 = arith.constant 0 : i32
    %c0_i32_0 = arith.constant 0 : i32
    %c0_i32_1 = arith.constant 0 : i32
    return %arg1, %c0_i32, %c0_i32_0 : i32, i32, i32
  }
  func.func @transform_9(%arg0: i32, %arg1: i32) -> (i32, i32, i32) {
    %c0_i32 = arith.constant 0 : i32
    %c0_i32_0 = arith.constant 0 : i32
    %c0_i32_1 = arith.constant 0 : i32
    return %arg1, %c0_i32, %c0_i32_0 : i32, i32, i32
  }
  func.func @transform_10(%arg0: i32, %arg1: i32) -> (i32, i32, i32) {
    %c0_i32 = arith.constant 0 : i32
    %c0_i32_0 = arith.constant 0 : i32
    %c0_i32_1 = arith.constant 0 : i32
    return %arg1, %c0_i32, %c0_i32_0 : i32, i32, i32
  }
  func.func @transform_11(%arg0: i32, %arg1: i32) -> (i32, i32, i32) {
    %c0_i32 = arith.constant 0 : i32
    %c0_i32_0 = arith.constant 0 : i32
    %c0_i32_1 = arith.constant 0 : i32
    return %arg1, %c0_i32, %c0_i32_0 : i32, i32, i32
  }
  func.func @transform_12(%arg0: i32, %arg1: i32) -> (i32, i32, i32) {
    %c0_i32 = arith.constant 0 : i32
    %c0_i32_0 = arith.constant 0 : i32
    %c0_i32_1 = arith.constant 0 : i32
    return %arg1, %c0_i32, %c0_i32_0 : i32, i32, i32
  }
  func.func @transform_13(%arg0: i32, %arg1: i32) -> (i32, i32, i32) {
    %c0_i32 = arith.constant 0 : i32
    %c0_i32_0 = arith.constant 0 : i32
    %c0_i32_1 = arith.constant 0 : i32
    return %arg1, %c0_i32, %c0_i32_0 : i32, i32, i32
  }
  func.func @transform_14(%arg0: i32, %arg1: i32) -> (i32, i32, i32) {
    %c0_i32 = arith.constant 0 : i32
    %c0_i32_0 = arith.constant 0 : i32
    %c0_i32_1 = arith.constant 0 : i32
    return %arg1, %c0_i32, %c0_i32_0 : i32, i32, i32
  }
  func.func @transform_15(%arg0: i32, %arg1: i32) -> (i32, i32) {
    %c0_i32 = arith.constant 0 : i32
    %c0_i32_0 = arith.constant 0 : i32
    return %arg0, %c0_i32 : i32, i32
  }
}

</mosaic_0001>

<llo_original>
// kernel: tpu_custom_call.1
$region0: #{tpu_custom_call.1}
  #allocation0 [shape = 'u32[]', space=smem, size = 0x4, offset = 0x4, fixed_abs, tag = 'smem constant byte address 0x4 - core index']
  #allocation1 [shape = 'u32[144,128]{1,0:T(1,128)}', space=vmem, size = 0x12000, scoped, tag = 'internal scratch']
  #allocation2 [shape = 'f32[16,32]{1,0:T(8,128)}', space=vmem, size = 0x2000, scoped, tag = 'scratch operand']
  %s0 = inlined_call_operand.hbm [shape: f32[16,8], index: 0, kind: input, shape index: {}]
  %s1 = inlined_call_operand.hbm [shape: bf16[8,32], index: 1, kind: input, shape index: {}]
  %s2 = inlined_call_operand.hbm [shape: f32[1,32], index: 2, kind: input, shape index: {}]
  %s3 = inlined_call_operand.hbm [shape: bf16[2,32,96], index: 3, kind: input, shape index: {}]
  %s4 = inlined_call_operand.hbm [shape: f32[2,1,96], index: 4, kind: input, shape index: {}]
  %s5 = inlined_call_operand.hbm [shape: bf16[2,32,32], index: 5, kind: input, shape index: {}]
  %s6 = inlined_call_operand.hbm [shape: f32[2,1,32], index: 6, kind: input, shape index: {}]
  %s7 = inlined_call_operand.hbm [shape: f32[2,1,32], index: 7, kind: input, shape index: {}]
  %s8 = inlined_call_operand.hbm [shape: f32[2,1,32], index: 8, kind: input, shape index: {}]
  %s9 = inlined_call_operand.hbm [shape: bf16[2,32,128], index: 9, kind: input, shape index: {}]
  %s10 = inlined_call_operand.hbm [shape: f32[2,1,128], index: 10, kind: input, shape index: {}]
  %s11 = inlined_call_operand.hbm [shape: bf16[2,128,32], index: 11, kind: input, shape index: {}]
  %s12 = inlined_call_operand.hbm [shape: f32[2,1,32], index: 12, kind: input, shape index: {}]
  %s13 = inlined_call_operand.hbm [shape: f32[2,1,32], index: 13, kind: input, shape index: {}]
  %s14 = inlined_call_operand.hbm [shape: f32[2,1,32], index: 14, kind: input, shape index: {}]
  %s15 = inlined_call_operand.hbm [shape: f32[2,32], index: 15, kind: output, shape index: {}]
  %s16 = sld [smem:[#allocation0]]
  $region161: #{tpu_custom_call.1} parent=0
    _
  %s18 = ssub.s32 1, %s16
  %s19 = scalar_select 0, %s18, %s16
  $region1: #{tpu_custom_call.1} parent=0
    #allocation3 [shape = 'u8[8192]{0}', space=vmem, size = 0x2000, scoped, tag = 'input window, operand 0, single buffered']
    #allocation4 [shape = 's32[2]{0}', space=sflag, size = 0x8, scoped, tag = 'scoped memory for tpu_custom_call.1']
    #allocation5 [shape = 's32[2]{0}', space=sflag, size = 0x8, scoped, tag = 'scoped memory for tpu_custom_call.1']
    #allocation6 [shape = 'u8[2048]{0}', space=vmem, size = 0x800, scoped, tag = 'input window, operand 1, single buffered']
    #allocation7 [shape = 's32[1]{0}', space=sflag, size = 0x4, scoped, tag = 'scoped memory for tpu_custom_call.1']
    #allocation8 [shape = 'u8[512]{0}', space=vmem, size = 0x400, scoped, tag = 'input window, operand 2, single buffered']
    #allocation9 [shape = 'u8[16384]{0}', space=vmem, size = 0x4000, scoped, tag = 'input window, operand 3']
    #allocation10 [shape = 's32[2]{0}', space=sflag, size = 0x8, scoped, tag = 'scoped memory for tpu_custom_call.1']
    #allocation11 [shape = 'u8[1024]{0}', space=vmem, size = 0x400, scoped, tag = 'input window, operand 4']
    #allocation12 [shape = 'u8[16384]{0}', space=vmem, size = 0x4000, scoped, tag = 'input window, operand 5']
    #allocation13 [shape = 's32[2]{0}', space=sflag, size = 0x8, scoped, tag = 'scoped memory for tpu_custom_call.1']
    #allocation14 [shape = 'u8[1024]{0}', space=vmem, size = 0x400, scoped, tag = 'input window, operand 6']
    #allocation15 [shape = 'u8[1024]{0}', space=vmem, size = 0x400, scoped, tag = 'input window, operand 7']
    #allocation16 [shape = 's32[2]{0}', space=sflag, size = 0x8, scoped, tag = 'scoped memory for tpu_custom_call.1']
    #allocation17 [shape = 'u8[1024]{0}', space=vmem, size = 0x400, scoped, tag = 'input window, operand 8']
    #allocation18 [shape = 'u8[16384]{0}', space=vmem, size = 0x4000, scoped, tag = 'input window, operand 9']
    #allocation19 [shape = 's32[2]{0}', space=sflag, size = 0x8, scoped, tag = 'scoped memory for tpu_custom_call.1']
    #allocation20 [shape = 'u8[1024]{0}', space=vmem, size = 0x400, scoped, tag = 'input window, operand 10']
    #allocation21 [shape = 'u8[65536]{0}', space=vmem, size = 0x10000, scoped, tag = 'input window, operand 11']
    #allocation22 [shape = 's32[2]{0}', space=sflag, size = 0x8, scoped, tag = 'scoped memory for tpu_custom_call.1']
    #allocation23 [shape = 'u8[1024]{0}', space=vmem, size = 0x400, scoped, tag = 'input window, operand 12']
    #allocation24 [shape = 'u8[1024]{0}', space=vmem, size = 0x400, scoped, tag = 'input window, operand 13']
    #allocation25 [shape = 's32[2]{0}', space=sflag, size = 0x8, scoped, tag = 'scoped memory for tpu_custom_call.1']
    #allocation26 [shape = 'u8[1024]{0}', space=vmem, size = 0x400, scoped, tag = 'input window, operand 14']
    #allocation27 [shape = 'u8[1024]{0}', space=vmem, size = 0x400, scoped, tag = 'output window, operand 0, single buffered']
    %20 = vsyncpa [#allocation4], 0
    %21 = vsyncpa [#allocation7], 0
    %22 = vsyncpa [#allocation10], 0
    %s23 = scalar_lea.sflag [#allocation10], 1
    %24 = vsyncpa %s23, 0
    %25 = vsyncpa [#allocation13], 0
    %s26 = scalar_lea.sflag [#allocation13], 1
    %27 = vsyncpa %s26, 0
    %28 = vsyncpa [#allocation16], 0
    %s29 = scalar_lea.sflag [#allocation16], 1
    %30 = vsyncpa %s29, 0
    %31 = vsyncpa [#allocation19], 0
    %s32 = scalar_lea.sflag [#allocation19], 1
    %33 = vsyncpa %s32, 0
    %34 = vsyncpa [#allocation22], 0
    %s35 = scalar_lea.sflag [#allocation22], 1
    %36 = vsyncpa %s35, 0
    %37 = vsyncpa [#allocation25], 0
    %s38 = scalar_lea.sflag [#allocation25], 1
    %39 = vsyncpa %s38, 0
    %40 = vsyncpa [#allocation5], 0
    loop: start=0, step=1, limit=4
    $region2: #{tpu_custom_call.1} parent=1 // loop_pre_header
      _
    $region3: #{tpu_custom_call.1} parent=1 // loop_header
      %s42 = sphi 0, %s46
      %p43 = scmp.ge.s32.totalorder %s42, 4
      %s49 = sphi 0, %s61
      %s50 = sphi 0, %s57
      %s51 = sphi 0, %s49
      %s52 = sphi 0, %s50
      %s53 = sphi 0, %s51
      %s54 = sphi 0, %s52
      %s64 = sphi 0, %s66
      %s67 = sphi 0, %s64
      %s68 = sphi 0, %s67
      %s84 = sphi 0, %s68
      %s88 = sphi 0, %s88
      %s90 = sphi 0, %s88
      %s91 = sphi 0, %s90
      %s105 = sphi 0, %s91
      %s109 = sphi 0, %s109
      %s111 = sphi 0, %s109
      %s112 = sphi 0, %s111
      %s126 = sphi 0, %s112
      %s132 = sphi 0, %s134
      %s135 = sphi 0, %s132
      %s136 = sphi 0, %s135
      %s152 = sphi 0, %s136
      %s158 = sphi 0, %s160
      %s161 = sphi 0, %s158
      %s162 = sphi 0, %s161
      %s178 = sphi 0, %s162
      %s184 = sphi 0, %s186
      %s187 = sphi 0, %s184
      %s188 = sphi 0, %s187
      %s204 = sphi 0, %s188
      %s210 = sphi 0, %s212
      %s213 = sphi 0, %s210
      %s214 = sphi 0, %s213
      %s230 = sphi 0, %s214
      %s236 = sphi 0, %s238
      %s239 = sphi 0, %s236
      %s240 = sphi 0, %s239
      %s256 = sphi 0, %s240
      %s262 = sphi 0, %s264
      %s265 = sphi 0, %s262
      %s266 = sphi 0, %s265
      %s282 = sphi 0, %s266
      %s288 = sphi 0, %s290
      %s291 = sphi 0, %s288
      %s292 = sphi 0, %s291
      %s308 = sphi 0, %s292
      %s314 = sphi 0, %s316
      %s317 = sphi 0, %s314
      %s318 = sphi 0, %s317
      %s334 = sphi 0, %s318
      %s340 = sphi 0, %s342
      %s343 = sphi 0, %s340
      %s344 = sphi 0, %s343
      %s360 = sphi 0, %s344
      %s366 = sphi 0, %s368
      %s369 = sphi 0, %s366
      %s370 = sphi 0, %s369
      %s386 = sphi 0, %s370
      %s392 = sphi 0, %s394
      %s395 = sphi 0, %s392
      %s396 = sphi 0, %s395
      %s412 = sphi 0, %s396
      %s418 = sphi 0, %s420
      %s421 = sphi 0, %s418
      %s422 = sphi 0, %s421
      %s438 = sphi 0, %s422
      %s444 = sphi 0, %s446
      %s447 = sphi 0, %s444
      %s448 = sphi 0, %s447
      %s464 = sphi 0, %s448
    $region4: #{tpu_custom_call.1} parent=1 // loop_header_branch
      %45 = sbr.rel (%p43) target = $region8
    $region5: #{tpu_custom_call.1} parent=1 // loop_body
      %s47 = ssub.s32 %s42, 1
      %s48 = ssub.s32 %s42, 2
      %s55 = sadd.s32 1, %s50
      %p56 = scmp.ge.s32.totalorder %s55, 2
      %s57 = scalar_select %p56, 0, %s55
      %s58 = sadd.s32 1, %s49
      %s59 = scalar_select %p56, %s58, %s49
      %p60 = scmp.ge.s32.totalorder %s59, 1
      %s61 = scalar_select %p60, 0, %s59
      %s62 = ssub.s32 %s49, %s61
      %p63 = scmp.eq.s32.totalorder %s62, 0
      %s65 = sadd.s32 %s64, 1
      %s66 = scalar_select %p63, %s64, %s65
      %p69 = pneg %p63
      %p70 = scmp.eq.s32.totalorder %s42, 1
      %p71 = por %p69, %p70
      %p72 = scmp.ne.s32.totalorder %s64, %s67
      %p73 = scmp.eq.s32.totalorder %s42, 0
      %p74 = por %p72, %p73
      %p75 = scmp.ne.s32.totalorder %s64, %s67
      %p76 = scmp.eq.s32.totalorder %s47, 1
      %p77 = por %p75, %p76
      %p78 = scmp.ne.s32.totalorder %s67, %s68
      %p79 = scmp.eq.s32.totalorder %s47, 0
      %p80 = por %p78, %p79
      %p81 = scmp.ne.s32.totalorder %s67, %s68
      %p82 = scmp.eq.s32.totalorder %s48, 1
      %p83 = por %p81, %p82
      %p85 = scmp.ne.s32.totalorder %s68, %s84
      %p86 = scmp.eq.s32.totalorder %s48, 0
      %p87 = por %p85, %p86
      %s89 = sadd.s32 %s88, 1
      %p92 = scmp.eq.s32.totalorder %s42, 1
      %p93 = scmp.ne.s32.totalorder %s88, %s90
      %p94 = scmp.eq.s32.totalorder %s42, 0
      %p95 = por %p93, %p94
      %p96 = scmp.ne.s32.totalorder %s88, %s90
      %p97 = scmp.eq.s32.totalorder %s47, 1
      %p98 = por %p96, %p97
      %p99 = scmp.ne.s32.totalorder %s90, %s91
      %p100 = scmp.eq.s32.totalorder %s47, 0
      %p101 = por %p99, %p100
      %p102 = scmp.ne.s32.totalorder %s90, %s91
      %p103 = scmp.eq.s32.totalorder %s48, 1
      %p104 = por %p102, %p103
      %p106 = scmp.ne.s32.totalorder %s91, %s105
      %p107 = scmp.eq.s32.totalorder %s48, 0
      %p108 = por %p106, %p107
      %s110 = sadd.s32 %s109, 1
      %p113 = scmp.eq.s32.totalorder %s42, 1
      %p114 = scmp.ne.s32.totalorder %s109, %s111
      %p115 = scmp.eq.s32.totalorder %s42, 0
      %p116 = por %p114, %p115
      %p117 = scmp.ne.s32.totalorder %s109, %s111
      %p118 = scmp.eq.s32.totalorder %s47, 1
      %p119 = por %p117, %p118
      %p120 = scmp.ne.s32.totalorder %s111, %s112
      %p121 = scmp.eq.s32.totalorder %s47, 0
      %p122 = por %p120, %p121
      %p123 = scmp.ne.s32.totalorder %s111, %s112
      %p124 = scmp.eq.s32.totalorder %s48, 1
      %p125 = por %p123, %p124
      %p127 = scmp.ne.s32.totalorder %s112, %s126
      %p128 = scmp.eq.s32.totalorder %s48, 0
      %p129 = por %p127, %p128
      %s130 = ssub.s32 %s50, %s57
      %p131 = scmp.eq.s32.totalorder %s130, 0
      %s133 = sadd.s32 %s132, 1
      %s134 = scalar_select %p131, %s132, %s133
      %p137 = pneg %p131
      %p138 = scmp.eq.s32.totalorder %s42, 1
      %p139 = por %p137, %p138
      %p140 = scmp.ne.s32.totalorder %s132, %s135
      %p141 = scmp.eq.s32.totalorder %s42, 0
      %p142 = por %p140, %p141
      %p143 = scmp.ne.s32.totalorder %s132, %s135
      %p144 = scmp.eq.s32.totalorder %s47, 1
      %p145 = por %p143, %p144
      %p146 = scmp.ne.s32.totalorder %s135, %s136
      %p147 = scmp.eq.s32.totalorder %s47, 0
      %p148 = por %p146, %p147
      %p149 = scmp.ne.s32.totalorder %s135, %s136
      %p150 = scmp.eq.s32.totalorder %s48, 1
      %p151 = por %p149, %p150
      %p153 = scmp.ne.s32.totalorder %s136, %s152
      %p154 = scmp.eq.s32.totalorder %s48, 0
      %p155 = por %p153, %p154
      %s156 = ssub.s32 %s50, %s57
      %p157 = scmp.eq.s32.totalorder %s156, 0
      %s159 = sadd.s32 %s158, 1
      %s160 = scalar_select %p157, %s158, %s159
      %p163 = pneg %p157
      %p164 = scmp.eq.s32.totalorder %s42, 1
      %p165 = por %p163, %p164
      %p166 = scmp.ne.s32.totalorder %s158, %s161
      %p167 = scmp.eq.s32.totalorder %s42, 0
      %p168 = por %p166, %p167
      %p169 = scmp.ne.s32.totalorder %s158, %s161
      %p170 = scmp.eq.s32.totalorder %s47, 1
      %p171 = por %p169, %p170
      %p172 = scmp.ne.s32.totalorder %s161, %s162
      %p173 = scmp.eq.s32.totalorder %s47, 0
      %p174 = por %p172, %p173
      %p175 = scmp.ne.s32.totalorder %s161, %s162
      %p176 = scmp.eq.s32.totalorder %s48, 1
      %p177 = por %p175, %p176
      %p179 = scmp.ne.s32.totalorder %s162, %s178
      %p180 = scmp.eq.s32.totalorder %s48, 0
      %p181 = por %p179, %p180
      %s182 = ssub.s32 %s50, %s57
      %p183 = scmp.eq.s32.totalorder %s182, 0
      %s185 = sadd.s32 %s184, 1
      %s186 = scalar_select %p183, %s184, %s185
      %p189 = pneg %p183
      %p190 = scmp.eq.s32.totalorder %s42, 1
      %p191 = por %p189, %p190
      %p192 = scmp.ne.s32.totalorder %s184, %s187
      %p193 = scmp.eq.s32.totalorder %s42, 0
      %p194 = por %p192, %p193
      %p195 = scmp.ne.s32.totalorder %s184, %s187
      %p196 = scmp.eq.s32.totalorder %s47, 1
      %p197 = por %p195, %p196
      %p198 = scmp.ne.s32.totalorder %s187, %s188
      %p199 = scmp.eq.s32.totalorder %s47, 0
      %p200 = por %p198, %p199
      %p201 = scmp.ne.s32.totalorder %s187, %s188
      %p202 = scmp.eq.s32.totalorder %s48, 1
      %p203 = por %p201, %p202
      %p205 = scmp.ne.s32.totalorder %s188, %s204
      %p206 = scmp.eq.s32.totalorder %s48, 0
      %p207 = por %p205, %p206
      %s208 = ssub.s32 %s50, %s57
      %p209 = scmp.eq.s32.totalorder %s208, 0
      %s211 = sadd.s32 %s210, 1
      %s212 = scalar_select %p209, %s210, %s211
      %p215 = pneg %p209
      %p216 = scmp.eq.s32.totalorder %s42, 1
      %p217 = por %p215, %p216
      %p218 = scmp.ne.s32.totalorder %s210, %s213
      %p219 = scmp.eq.s32.totalorder %s42, 0
      %p220 = por %p218, %p219
      %p221 = scmp.ne.s32.totalorder %s210, %s213
      %p222 = scmp.eq.s32.totalorder %s47, 1
      %p223 = por %p221, %p222
      %p224 = scmp.ne.s32.totalorder %s213, %s214
      %p225 = scmp.eq.s32.totalorder %s47, 0
      %p226 = por %p224, %p225
      %p227 = scmp.ne.s32.totalorder %s213, %s214
      %p228 = scmp.eq.s32.totalorder %s48, 1
      %p229 = por %p227, %p228
      %p231 = scmp.ne.s32.totalorder %s214, %s230
      %p232 = scmp.eq.s32.totalorder %s48, 0
      %p233 = por %p231, %p232
      %s234 = ssub.s32 %s50, %s57
      %p235 = scmp.eq.s32.totalorder %s234, 0
      %s237 = sadd.s32 %s236, 1
      %s238 = scalar_select %p235, %s236, %s237
      %p241 = pneg %p235
      %p242 = scmp.eq.s32.totalorder %s42, 1
      %p243 = por %p241, %p242
      %p244 = scmp.ne.s32.totalorder %s236, %s239
      %p245 = scmp.eq.s32.totalorder %s42, 0
      %p246 = por %p244, %p245
      %p247 = scmp.ne.s32.totalorder %s236, %s239
      %p248 = scmp.eq.s32.totalorder %s47, 1
      %p249 = por %p247, %p248
      %p250 = scmp.ne.s32.totalorder %s239, %s240
      %p251 = scmp.eq.s32.totalorder %s47, 0
      %p252 = por %p250, %p251
      %p253 = scmp.ne.s32.totalorder %s239, %s240
      %p254 = scmp.eq.s32.totalorder %s48, 1
      %p255 = por %p253, %p254
      %p257 = scmp.ne.s32.totalorder %s240, %s256
      %p258 = scmp.eq.s32.totalorder %s48, 0
      %p259 = por %p257, %p258
      %s260 = ssub.s32 %s50, %s57
      %p261 = scmp.eq.s32.totalorder %s260, 0
      %s263 = sadd.s32 %s262, 1
      %s264 = scalar_select %p261, %s262, %s263
      %p267 = pneg %p261
      %p268 = scmp.eq.s32.totalorder %s42, 1
      %p269 = por %p267, %p268
      %p270 = scmp.ne.s32.totalorder %s262, %s265
      %p271 = scmp.eq.s32.totalorder %s42, 0
      %p272 = por %p270, %p271
      %p273 = scmp.ne.s32.totalorder %s262, %s265
      %p274 = scmp.eq.s32.totalorder %s47, 1
      %p275 = por %p273, %p274
      %p276 = scmp.ne.s32.totalorder %s265, %s266
      %p277 = scmp.eq.s32.totalorder %s47, 0
      %p278 = por %p276, %p277
      %p279 = scmp.ne.s32.totalorder %s265, %s266
      %p280 = scmp.eq.s32.totalorder %s48, 1
      %p281 = por %p279, %p280
      %p283 = scmp.ne.s32.totalorder %s266, %s282
      %p284 = scmp.eq.s32.totalorder %s48, 0
      %p285 = por %p283, %p284
      %s286 = ssub.s32 %s50, %s57
      %p287 = scmp.eq.s32.totalorder %s286, 0
      %s289 = sadd.s32 %s288, 1
      %s290 = scalar_select %p287, %s288, %s289
      %p293 = pneg %p287
      %p294 = scmp.eq.s32.totalorder %s42, 1
      %p295 = por %p293, %p294
      %p296 = scmp.ne.s32.totalorder %s288, %s291
      %p297 = scmp.eq.s32.totalorder %s42, 0
      %p298 = por %p296, %p297
      %p299 = scmp.ne.s32.totalorder %s288, %s291
      %p300 = scmp.eq.s32.totalorder %s47, 1
      %p301 = por %p299, %p300
      %p302 = scmp.ne.s32.totalorder %s291, %s292
      %p303 = scmp.eq.s32.totalorder %s47, 0
      %p304 = por %p302, %p303
      %p305 = scmp.ne.s32.totalorder %s291, %s292
      %p306 = scmp.eq.s32.totalorder %s48, 1
      %p307 = por %p305, %p306
      %p309 = scmp.ne.s32.totalorder %s292, %s308
      %p310 = scmp.eq.s32.totalorder %s48, 0
      %p311 = por %p309, %p310
      %s312 = ssub.s32 %s50, %s57
      %p313 = scmp.eq.s32.totalorder %s312, 0
      %s315 = sadd.s32 %s314, 1
      %s316 = scalar_select %p313, %s314, %s315
      %p319 = pneg %p313
      %p320 = scmp.eq.s32.totalorder %s42, 1
      %p321 = por %p319, %p320
      %p322 = scmp.ne.s32.totalorder %s314, %s317
      %p323 = scmp.eq.s32.totalorder %s42, 0
      %p324 = por %p322, %p323
      %p325 = scmp.ne.s32.totalorder %s314, %s317
      %p326 = scmp.eq.s32.totalorder %s47, 1
      %p327 = por %p325, %p326
      %p328 = scmp.ne.s32.totalorder %s317, %s318
      %p329 = scmp.eq.s32.totalorder %s47, 0
      %p330 = por %p328, %p329
      %p331 = scmp.ne.s32.totalorder %s317, %s318
      %p332 = scmp.eq.s32.totalorder %s48, 1
      %p333 = por %p331, %p332
      %p335 = scmp.ne.s32.totalorder %s318, %s334
      %p336 = scmp.eq.s32.totalorder %s48, 0
      %p337 = por %p335, %p336
      %s338 = ssub.s32 %s50, %s57
      %p339 = scmp.eq.s32.totalorder %s338, 0
      %s341 = sadd.s32 %s340, 1
      %s342 = scalar_select %p339, %s340, %s341
      %p345 = pneg %p339
      %p346 = scmp.eq.s32.totalorder %s42, 1
      %p347 = por %p345, %p346
      %p348 = scmp.ne.s32.totalorder %s340, %s343
      %p349 = scmp.eq.s32.totalorder %s42, 0
      %p350 = por %p348, %p349
      %p351 = scmp.ne.s32.totalorder %s340, %s343
      %p352 = scmp.eq.s32.totalorder %s47, 1
      %p353 = por %p351, %p352
      %p354 = scmp.ne.s32.totalorder %s343, %s344
      %p355 = scmp.eq.s32.totalorder %s47, 0
      %p356 = por %p354, %p355
      %p357 = scmp.ne.s32.totalorder %s343, %s344
      %p358 = scmp.eq.s32.totalorder %s48, 1
      %p359 = por %p357, %p358
      %p361 = scmp.ne.s32.totalorder %s344, %s360
      %p362 = scmp.eq.s32.totalorder %s48, 0
      %p363 = por %p361, %p362
      %s364 = ssub.s32 %s50, %s57
      %p365 = scmp.eq.s32.totalorder %s364, 0
      %s367 = sadd.s32 %s366, 1
      %s368 = scalar_select %p365, %s366, %s367
      %p371 = pneg %p365
      %p372 = scmp.eq.s32.totalorder %s42, 1
      %p373 = por %p371, %p372
      %p374 = scmp.ne.s32.totalorder %s366, %s369
      %p375 = scmp.eq.s32.totalorder %s42, 0
      %p376 = por %p374, %p375
      %p377 = scmp.ne.s32.totalorder %s366, %s369
      %p378 = scmp.eq.s32.totalorder %s47, 1
      %p379 = por %p377, %p378
      %p380 = scmp.ne.s32.totalorder %s369, %s370
      %p381 = scmp.eq.s32.totalorder %s47, 0
      %p382 = por %p380, %p381
      %p383 = scmp.ne.s32.totalorder %s369, %s370
      %p384 = scmp.eq.s32.totalorder %s48, 1
      %p385 = por %p383, %p384
      %p387 = scmp.ne.s32.totalorder %s370, %s386
      %p388 = scmp.eq.s32.totalorder %s48, 0
      %p389 = por %p387, %p388
      %s390 = ssub.s32 %s50, %s57
      %p391 = scmp.eq.s32.totalorder %s390, 0
      %s393 = sadd.s32 %s392, 1
      %s394 = scalar_select %p391, %s392, %s393
      %p397 = pneg %p391
      %p398 = scmp.eq.s32.totalorder %s42, 1
      %p399 = por %p397, %p398
      %p400 = scmp.ne.s32.totalorder %s392, %s395
      %p401 = scmp.eq.s32.totalorder %s42, 0
      %p402 = por %p400, %p401
      %p403 = scmp.ne.s32.totalorder %s392, %s395
      %p404 = scmp.eq.s32.totalorder %s47, 1
      %p405 = por %p403, %p404
      %p406 = scmp.ne.s32.totalorder %s395, %s396
      %p407 = scmp.eq.s32.totalorder %s47, 0
      %p408 = por %p406, %p407
      %p409 = scmp.ne.s32.totalorder %s395, %s396
      %p410 = scmp.eq.s32.totalorder %s48, 1
      %p411 = por %p409, %p410
      %p413 = scmp.ne.s32.totalorder %s396, %s412
      %p414 = scmp.eq.s32.totalorder %s48, 0
      %p415 = por %p413, %p414
      %s416 = ssub.s32 %s50, %s57
      %p417 = scmp.eq.s32.totalorder %s416, 0
      %s419 = sadd.s32 %s418, 1
      %s420 = scalar_select %p417, %s418, %s419
      %p423 = pneg %p417
      %p424 = scmp.eq.s32.totalorder %s42, 1
      %p425 = por %p423, %p424
      %p426 = scmp.ne.s32.totalorder %s418, %s421
      %p427 = scmp.eq.s32.totalorder %s42, 0
      %p428 = por %p426, %p427
      %p429 = scmp.ne.s32.totalorder %s418, %s421
      %p430 = scmp.eq.s32.totalorder %s47, 1
      %p431 = por %p429, %p430
      %p432 = scmp.ne.s32.totalorder %s421, %s422
      %p433 = scmp.eq.s32.totalorder %s47, 0
      %p434 = por %p432, %p433
      %p435 = scmp.ne.s32.totalorder %s421, %s422
      %p436 = scmp.eq.s32.totalorder %s48, 1
      %p437 = por %p435, %p436
      %p439 = scmp.ne.s32.totalorder %s422, %s438
      %p440 = scmp.eq.s32.totalorder %s48, 0
      %p441 = por %p439, %p440
      %s442 = ssub.s32 %s49, %s61
      %p443 = scmp.eq.s32.totalorder %s442, 0
      %s445 = sadd.s32 %s444, 1
      %s446 = scalar_select %p443, %s444, %s445
      %p449 = pneg %p443
      %p450 = scmp.eq.s32.totalorder %s42, 1
      %p451 = por %p449, %p450
      %p452 = scmp.ne.s32.totalorder %s444, %s447
      %p453 = scmp.eq.s32.totalorder %s42, 0
      %p454 = por %p452, %p453
      %p455 = scmp.ne.s32.totalorder %s444, %s447
      %p456 = scmp.eq.s32.totalorder %s47, 1
      %p457 = por %p455, %p456
      %p458 = scmp.ne.s32.totalorder %s447, %s448
      %p459 = scmp.eq.s32.totalorder %s47, 0
      %p460 = por %p458, %p459
      %p461 = scmp.ne.s32.totalorder %s447, %s448
      %p462 = scmp.eq.s32.totalorder %s48, 1
      %p463 = por %p461, %p462
      %p465 = scmp.ne.s32.totalorder %s448, %s464
      %p466 = scmp.eq.s32.totalorder %s48, 0
      %p467 = por %p465, %p466
      %p468 = scmp.le.s32.totalorder 1, %s42
      %p469 = scmp.lt.s32.totalorder %s42, 3
      %p470 = pnand %p468, %p469
      %p471 = pneg %p470
      // Predicated region
      $region9: #{tpu_custom_call.1} parent=5 // pred_check
        _
      $region10: #{tpu_custom_call.1} parent=5 // pred_check_branch
        %473 = sbr.rel (%p470) target = $region12
      $region11: #{tpu_custom_call.1} parent=5 // pred_region
        %s474 = ssub.s32 %s42, 1
        // Predicated region
        $region13: #{tpu_custom_call.1} parent=11 // pred_check
          %p475 = pneg %p80
        $region14: #{tpu_custom_call.1} parent=11 // pred_check_branch
          %477 = sbr.rel (%p475) target = $region16
        $region15: #{tpu_custom_call.1} parent=11 // pred_region
          %s478 = smul.u32 2, %s51
          %s480 = ssub.s32 256, 256
          %481 = vsyncadd [#allocation4], %s480
          %s482 = smul.addr %s478, 128
          %s483 = scalar_lea.hbm %s0, %s482
          %s484 = sshll.u32 [#allocation3], 4
          %s485 = int_to_ptr.vmem [resolvable:$true] %s484
          %490 = dma.hbm_to_vmem [thread:$0]  %s483, 256, %s485, [#allocation4], 128, 128, 8
        $region16: #{tpu_custom_call.1} parent=11 // pred_fallthru
          _
        // Predicated region
        $region17: #{tpu_custom_call.1} parent=11 // pred_check
          %p491 = pneg %p101
        $region18: #{tpu_custom_call.1} parent=11 // pred_check_branch
          %493 = sbr.rel (%p491) target = $region20
        $region19: #{tpu_custom_call.1} parent=11 // pred_region
          %s495 = ssub.s32 64, 64
          %496 = vsyncadd [#allocation7], %s495
          %s498 = sshll.u32 [#allocation6], 4
          %s499 = int_to_ptr.vmem [resolvable:$true] %s498
          %501 = dma.hbm_to_vmem [thread:$0]  %s1, 64, %s499, [#allocation7]
        $region20: #{tpu_custom_call.1} parent=11 // pred_fallthru
          _
        // Predicated region
        $region21: #{tpu_custom_call.1} parent=11 // pred_check
          %p502 = pneg %p122
        $region22: #{tpu_custom_call.1} parent=11 // pred_check_branch
          %504 = sbr.rel (%p502) target = $region24
        $region23: #{tpu_custom_call.1} parent=11 // pred_region
          %s506 = ssub.s32 16, 16
          %507 = vsyncadd [#allocation7], %s506
          %s509 = sshll.u32 [#allocation8], 4
          %s510 = int_to_ptr.vmem [resolvable:$true] %s509
          %512 = dma.hbm_to_vmem [thread:$0]  %s2, 16, %s510, [#allocation7]
        $region24: #{tpu_custom_call.1} parent=11 // pred_fallthru
          _
      $region12: #{tpu_custom_call.1} parent=5 // pred_fallthru
        _
      %p513 = scmp.lt.s32.totalorder %s42, 2
      // Predicated region
      $region25: #{tpu_custom_call.1} parent=5 // pred_check
        %p514 = pneg %p513
      $region26: #{tpu_custom_call.1} parent=5 // pred_check_branch
        %516 = sbr.rel (%p514) target = $region28
      $region27: #{tpu_custom_call.1} parent=5 // pred_region
        // Predicated region
        $region29: #{tpu_custom_call.1} parent=27 // pred_check
          %p517 = pneg %p142
        $region30: #{tpu_custom_call.1} parent=27 // pred_check_branch
          %519 = sbr.rel (%p517) target = $region32
        $region31: #{tpu_custom_call.1} parent=27 // pred_region
          %s520 = sand.u32 %s42, 1
          %s521 = scalar_lea.sflag [#allocation10], %s520
          %s522 = sand.u32 %s132, 1
          %s523 = smul.addr %s522, 16
          %s524 = scalar_lea.vmem [#allocation9], %s523
          %s526 = ssub.s32 256, 256
          %527 = vsyncadd %s521, %s526
          %s528 = smul.addr %s50, 4
          %s529 = smul.addr %s528, 64
          %s530 = scalar_lea.hbm %s3, %s529
          %s531 = sshll.u32 %s524, 4
          %s532 = int_to_ptr.vmem [resolvable:$true] %s531
          %537 = dma.hbm_to_vmem [thread:$0]  %s530, 256, %s532, %s521, 64, 64, 4
        $region32: #{tpu_custom_call.1} parent=27 // pred_fallthru
          _
        // Predicated region
        $region33: #{tpu_custom_call.1} parent=27 // pred_check
          %p538 = pneg %p168
        $region34: #{tpu_custom_call.1} parent=27 // pred_check_branch
          %540 = sbr.rel (%p538) target = $region36
        $region35: #{tpu_custom_call.1} parent=27 // pred_region
          %s541 = sand.u32 %s42, 1
          %s542 = scalar_lea.sflag [#allocation10], %s541
          %s543 = sand.u32 %s158, 1
          %s544 = scalar_lea.vmem [#allocation11], %s543
          %s546 = ssub.s32 16, 16
          %547 = vsyncadd %s542, %s546
          %s548 = smul.addr %s50, 16
          %s549 = scalar_lea.hbm %s4, %s548
          %s551 = sshll.u32 %s544, 4
          %s552 = int_to_ptr.vmem [resolvable:$true] %s551
          %554 = dma.hbm_to_vmem [thread:$0]  %s549, 16, %s552, %s542
        $region36: #{tpu_custom_call.1} parent=27 // pred_fallthru
          _
        // Predicated region
        $region37: #{tpu_custom_call.1} parent=27 // pred_check
          %p555 = pneg %p194
        $region38: #{tpu_custom_call.1} parent=27 // pred_check_branch
          %557 = sbr.rel (%p555) target = $region40
        $region39: #{tpu_custom_call.1} parent=27 // pred_region
          %s558 = sand.u32 %s42, 1
          %s559 = scalar_lea.sflag [#allocation13], %s558
          %s560 = sand.u32 %s184, 1
          %s561 = smul.addr %s560, 16
          %s562 = scalar_lea.vmem [#allocation12], %s561
          %s564 = ssub.s32 256, 256
          %565 = vsyncadd %s559, %s564
          %s566 = smul.addr %s50, 4
          %s567 = smul.addr %s566, 64
          %s568 = scalar_lea.hbm %s5, %s567
          %s569 = sshll.u32 %s562, 4
          %s570 = int_to_ptr.vmem [resolvable:$true] %s569
          %575 = dma.hbm_to_vmem [thread:$0]  %s568, 256, %s570, %s559, 64, 64, 4
        $region40: #{tpu_custom_call.1} parent=27 // pred_fallthru
          _
        // Predicated region
        $region41: #{tpu_custom_call.1} parent=27 // pred_check
          %p576 = pneg %p220
        $region42: #{tpu_custom_call.1} parent=27 // pred_check_branch
          %578 = sbr.rel (%p576) target = $region44
        $region43: #{tpu_custom_call.1} parent=27 // pred_region
          %s579 = sand.u32 %s42, 1
          %s580 = scalar_lea.sflag [#allocation13], %s579
          %s581 = sand.u32 %s210, 1
          %s582 = scalar_lea.vmem [#allocation14], %s581
          %s584 = ssub.s32 16, 16
          %585 = vsyncadd %s580, %s584
          %s586 = smul.addr %s50, 16
          %s587 = scalar_lea.hbm %s6, %s586
          %s589 = sshll.u32 %s582, 4
          %s590 = int_to_ptr.vmem [resolvable:$true] %s589
          %592 = dma.hbm_to_vmem [thread:$0]  %s587, 16, %s590, %s580
        $region44: #{tpu_custom_call.1} parent=27 // pred_fallthru
          _
        // Predicated region
        $region45: #{tpu_custom_call.1} parent=27 // pred_check
          %p593 = pneg %p246
        $region46: #{tpu_custom_call.1} parent=27 // pred_check_branch
          %595 = sbr.rel (%p593) target = $region48
        $region47: #{tpu_custom_call.1} parent=27 // pred_region
          %s596 = sand.u32 %s42, 1
          %s597 = scalar_lea.sflag [#allocation16], %s596
          %s598 = sand.u32 %s236, 1
          %s599 = scalar_lea.vmem [#allocation15], %s598
          %s601 = ssub.s32 16, 16
          %602 = vsyncadd %s597, %s601
          %s603 = smul.addr %s50, 16
          %s604 = scalar_lea.hbm %s7, %s603
          %s606 = sshll.u32 %s599, 4
          %s607 = int_to_ptr.vmem [resolvable:$true] %s606
          %609 = dma.hbm_to_vmem [thread:$0]  %s604, 16, %s607, %s597
        $region48: #{tpu_custom_call.1} parent=27 // pred_fallthru
          _
        // Predicated region
        $region49: #{tpu_custom_call.1} parent=27 // pred_check
          %p610 = pneg %p272
        $region50: #{tpu_custom_call.1} parent=27 // pred_check_branch
          %612 = sbr.rel (%p610) target = $region52
        $region51: #{tpu_custom_call.1} parent=27 // pred_region
          %s613 = sand.u32 %s42, 1
          %s614 = scalar_lea.sflag [#allocation16], %s613
          %s615 = sand.u32 %s262, 1
          %s616 = scalar_lea.vmem [#allocation17], %s615
          %s618 = ssub.s32 16, 16
          %619 = vsyncadd %s614, %s618
          %s620 = smul.addr %s50, 16
          %s621 = scalar_lea.hbm %s8, %s620
          %s623 = sshll.u32 %s616, 4
          %s624 = int_to_ptr.vmem [resolvable:$true] %s623
          %626 = dma.hbm_to_vmem [thread:$0]  %s621, 16, %s624, %s614
        $region52: #{tpu_custom_call.1} parent=27 // pred_fallthru
          _
        // Predicated region
        $region53: #{tpu_custom_call.1} parent=27 // pred_check
          %p627 = pneg %p298
        $region54: #{tpu_custom_call.1} parent=27 // pred_check_branch
          %629 = sbr.rel (%p627) target = $region56
        $region55: #{tpu_custom_call.1} parent=27 // pred_region
          %s630 = sand.u32 %s42, 1
          %s631 = scalar_lea.sflag [#allocation19], %s630
          %s632 = sand.u32 %s288, 1
          %s633 = smul.addr %s632, 16
          %s634 = scalar_lea.vmem [#allocation18], %s633
          %s636 = ssub.s32 256, 256
          %637 = vsyncadd %s631, %s636
          %s638 = smul.addr %s50, 4
          %s639 = smul.addr %s638, 64
          %s640 = scalar_lea.hbm %s9, %s639
          %s641 = sshll.u32 %s634, 4
          %s642 = int_to_ptr.vmem [resolvable:$true] %s641
          %647 = dma.hbm_to_vmem [thread:$0]  %s640, 256, %s642, %s631, 64, 64, 4
        $region56: #{tpu_custom_call.1} parent=27 // pred_fallthru
          _
        // Predicated region
        $region57: #{tpu_custom_call.1} parent=27 // pred_check
          %p648 = pneg %p324
        $region58: #{tpu_custom_call.1} parent=27 // pred_check_branch
          %650 = sbr.rel (%p648) target = $region60
        $region59: #{tpu_custom_call.1} parent=27 // pred_region
          %s651 = sand.u32 %s42, 1
          %s652 = scalar_lea.sflag [#allocation19], %s651
          %s653 = sand.u32 %s314, 1
          %s654 = scalar_lea.vmem [#allocation20], %s653
          %s656 = ssub.s32 16, 16
          %657 = vsyncadd %s652, %s656
          %s658 = smul.addr %s50, 16
          %s659 = scalar_lea.hbm %s10, %s658
          %s661 = sshll.u32 %s654, 4
          %s662 = int_to_ptr.vmem [resolvable:$true] %s661
          %664 = dma.hbm_to_vmem [thread:$0]  %s659, 16, %s662, %s652
        $region60: #{tpu_custom_call.1} parent=27 // pred_fallthru
          _
        // Predicated region
        $region61: #{tpu_custom_call.1} parent=27 // pred_check
          %p665 = pneg %p350
        $region62: #{tpu_custom_call.1} parent=27 // pred_check_branch
          %667 = sbr.rel (%p665) target = $region64
        $region63: #{tpu_custom_call.1} parent=27 // pred_region
          %s668 = sand.u32 %s42, 1
          %s669 = scalar_lea.sflag [#allocation22], %s668
          %s670 = sand.u32 %s340, 1
          %s671 = smul.addr %s670, 64
          %s672 = scalar_lea.vmem [#allocation21], %s671
          %s674 = ssub.s32 1024, 1024
          %675 = vsyncadd %s669, %s674
          %s676 = smul.addr %s50, 16
          %s677 = smul.addr %s676, 64
          %s678 = scalar_lea.hbm %s11, %s677
          %s679 = sshll.u32 %s672, 4
          %s680 = int_to_ptr.vmem [resolvable:$true] %s679
          %685 = dma.hbm_to_vmem [thread:$0]  %s678, 1024, %s680, %s669, 64, 64, 4
        $region64: #{tpu_custom_call.1} parent=27 // pred_fallthru
          _
        // Predicated region
        $region65: #{tpu_custom_call.1} parent=27 // pred_check
          %p686 = pneg %p376
        $region66: #{tpu_custom_call.1} parent=27 // pred_check_branch
          %688 = sbr.rel (%p686) target = $region68
        $region67: #{tpu_custom_call.1} parent=27 // pred_region
          %s689 = sand.u32 %s42, 1
          %s690 = scalar_lea.sflag [#allocation22], %s689
          %s691 = sand.u32 %s366, 1
          %s692 = scalar_lea.vmem [#allocation23], %s691
          %s694 = ssub.s32 16, 16
          %695 = vsyncadd %s690, %s694
          %s696 = smul.addr %s50, 16
          %s697 = scalar_lea.hbm %s12, %s696
          %s699 = sshll.u32 %s692, 4
          %s700 = int_to_ptr.vmem [resolvable:$true] %s699
          %702 = dma.hbm_to_vmem [thread:$0]  %s697, 16, %s700, %s690
        $region68: #{tpu_custom_call.1} parent=27 // pred_fallthru
          _
        // Predicated region
        $region69: #{tpu_custom_call.1} parent=27 // pred_check
          %p703 = pneg %p402
        $region70: #{tpu_custom_call.1} parent=27 // pred_check_branch
          %705 = sbr.rel (%p703) target = $region72
        $region71: #{tpu_custom_call.1} parent=27 // pred_region
          %s706 = sand.u32 %s42, 1
          %s707 = scalar_lea.sflag [#allocation25], %s706
          %s708 = sand.u32 %s392, 1
          %s709 = scalar_lea.vmem [#allocation24], %s708
          %s711 = ssub.s32 16, 16
          %712 = vsyncadd %s707, %s711
          %s713 = smul.addr %s50, 16
          %s714 = scalar_lea.hbm %s13, %s713
          %s716 = sshll.u32 %s709, 4
          %s717 = int_to_ptr.vmem [resolvable:$true] %s716
          %719 = dma.hbm_to_vmem [thread:$0]  %s714, 16, %s717, %s707
        $region72: #{tpu_custom_call.1} parent=27 // pred_fallthru
          _
        // Predicated region
        $region73: #{tpu_custom_call.1} parent=27 // pred_check
          %p720 = pneg %p428
        $region74: #{tpu_custom_call.1} parent=27 // pred_check_branch
          %722 = sbr.rel (%p720) target = $region76
        $region75: #{tpu_custom_call.1} parent=27 // pred_region
          %s723 = sand.u32 %s42, 1
          %s724 = scalar_lea.sflag [#allocation25], %s723
          %s725 = sand.u32 %s418, 1
          %s726 = scalar_lea.vmem [#allocation26], %s725
          %s728 = ssub.s32 16, 16
          %729 = vsyncadd %s724, %s728
          %s730 = smul.addr %s50, 16
          %s731 = scalar_lea.hbm %s14, %s730
          %s733 = sshll.u32 %s726, 4
          %s734 = int_to_ptr.vmem [resolvable:$true] %s733
          %736 = dma.hbm_to_vmem [thread:$0]  %s731, 16, %s734, %s724
        $region76: #{tpu_custom_call.1} parent=27 // pred_fallthru
          _
      $region28: #{tpu_custom_call.1} parent=5 // pred_fallthru
        _
      %p737 = scmp.le.s32.totalorder 1, %s42
      %p738 = scmp.lt.s32.totalorder %s42, 3
      %p739 = pnand %p737, %p738
      %p740 = pneg %p739
      // Predicated region
      $region77: #{tpu_custom_call.1} parent=5 // pred_check
        _
      $region78: #{tpu_custom_call.1} parent=5 // pred_check_branch
        %742 = sbr.rel (%p739) target = $region80
      $region79: #{tpu_custom_call.1} parent=5 // pred_region
        %s743 = ssub.s32 %s42, 1
        // Predicated region
        $region81: #{tpu_custom_call.1} parent=79 // pred_check
          %p744 = pneg %p80
        $region82: #{tpu_custom_call.1} parent=79 // pred_check_branch
          %746 = sbr.rel (%p744) target = $region84
        $region83: #{tpu_custom_call.1} parent=79 // pred_region
          %747 = dma.done [#allocation4], 256
        $region84: #{tpu_custom_call.1} parent=79 // pred_fallthru
          _
        // Predicated region
        $region85: #{tpu_custom_call.1} parent=79 // pred_check
          %p748 = pneg %p101
        $region86: #{tpu_custom_call.1} parent=79 // pred_check_branch
          %750 = sbr.rel (%p748) target = $region88
        $region87: #{tpu_custom_call.1} parent=79 // pred_region
          %751 = dma.done [#allocation7], 64
        $region88: #{tpu_custom_call.1} parent=79 // pred_fallthru
          _
        // Predicated region
        $region89: #{tpu_custom_call.1} parent=79 // pred_check
          %p752 = pneg %p122
        $region90: #{tpu_custom_call.1} parent=79 // pred_check_branch
          %754 = sbr.rel (%p752) target = $region92
        $region91: #{tpu_custom_call.1} parent=79 // pred_region
          %755 = dma.done [#allocation7], 16
        $region92: #{tpu_custom_call.1} parent=79 // pred_fallthru
          _
        %s756 = sand.u32 %s47, 1
        %s757 = scalar_lea.sflag [#allocation10], %s756
        %s758 = sand.u32 %s135, 1
        %s759 = smul.addr %s758, 16
        %s760 = scalar_lea.vmem [#allocation9], %s759
        // Predicated region
        $region93: #{tpu_custom_call.1} parent=79 // pred_check
          %p761 = pneg %p148
        $region94: #{tpu_custom_call.1} parent=79 // pred_check_branch
          %763 = sbr.rel (%p761) target = $region96
        $region95: #{tpu_custom_call.1} parent=79 // pred_region
          %764 = dma.done %s757, 256
        $region96: #{tpu_custom_call.1} parent=79 // pred_fallthru
          _
        %s765 = sand.u32 %s47, 1
        %s766 = scalar_lea.sflag [#allocation10], %s765
        %s767 = sand.u32 %s161, 1
        %s768 = scalar_lea.vmem [#allocation11], %s767
        // Predicated region
        $region97: #{tpu_custom_call.1} parent=79 // pred_check
          %p769 = pneg %p174
        $region98: #{tpu_custom_call.1} parent=79 // pred_check_branch
          %771 = sbr.rel (%p769) target = $region100
        $region99: #{tpu_custom_call.1} parent=79 // pred_region
          %772 = dma.done %s766, 16
        $region100: #{tpu_custom_call.1} parent=79 // pred_fallthru
          _
        %s773 = sand.u32 %s47, 1
        %s774 = scalar_lea.sflag [#allocation13], %s773
        %s775 = sand.u32 %s187, 1
        %s776 = smul.addr %s775, 16
        %s777 = scalar_lea.vmem [#allocation12], %s776
        // Predicated region
        $region101: #{tpu_custom_call.1} parent=79 // pred_check
          %p778 = pneg %p200
        $region102: #{tpu_custom_call.1} parent=79 // pred_check_branch
          %780 = sbr.rel (%p778) target = $region104
        $region103: #{tpu_custom_call.1} parent=79 // pred_region
          %781 = dma.done %s774, 256
        $region104: #{tpu_custom_call.1} parent=79 // pred_fallthru
          _
        %s782 = sand.u32 %s47, 1
        %s783 = scalar_lea.sflag [#allocation13], %s782
        %s784 = sand.u32 %s213, 1
        %s785 = scalar_lea.vmem [#allocation14], %s784
        // Predicated region
        $region105: #{tpu_custom_call.1} parent=79 // pred_check
          %p786 = pneg %p226
        $region106: #{tpu_custom_call.1} parent=79 // pred_check_branch
          %788 = sbr.rel (%p786) target = $region108
        $region107: #{tpu_custom_call.1} parent=79 // pred_region
          %789 = dma.done %s783, 16
        $region108: #{tpu_custom_call.1} parent=79 // pred_fallthru
          _
        %s790 = sand.u32 %s47, 1
        %s791 = scalar_lea.sflag [#allocation16], %s790
        %s792 = sand.u32 %s239, 1
        %s793 = scalar_lea.vmem [#allocation15], %s792
        // Predicated region
        $region109: #{tpu_custom_call.1} parent=79 // pred_check
          %p794 = pneg %p252
        $region110: #{tpu_custom_call.1} parent=79 // pred_check_branch
          %796 = sbr.rel (%p794) target = $region112
        $region111: #{tpu_custom_call.1} parent=79 // pred_region
          %797 = dma.done %s791, 16
        $region112: #{tpu_custom_call.1} parent=79 // pred_fallthru
          _
        %s798 = sand.u32 %s47, 1
        %s799 = scalar_lea.sflag [#allocation16], %s798
        %s800 = sand.u32 %s265, 1
        %s801 = scalar_lea.vmem [#allocation17], %s800
        // Predicated region
        $region113: #{tpu_custom_call.1} parent=79 // pred_check
          %p802 = pneg %p278
        $region114: #{tpu_custom_call.1} parent=79 // pred_check_branch
          %804 = sbr.rel (%p802) target = $region116
        $region115: #{tpu_custom_call.1} parent=79 // pred_region
          %805 = dma.done %s799, 16
        $region116: #{tpu_custom_call.1} parent=79 // pred_fallthru
          _
        %s806 = sand.u32 %s47, 1
        %s807 = scalar_lea.sflag [#allocation19], %s806
        %s808 = sand.u32 %s291, 1
        %s809 = smul.addr %s808, 16
        %s810 = scalar_lea.vmem [#allocation18], %s809
        // Predicated region
        $region117: #{tpu_custom_call.1} parent=79 // pred_check
          %p811 = pneg %p304
        $region118: #{tpu_custom_call.1} parent=79 // pred_check_branch
          %813 = sbr.rel (%p811) target = $region120
        $region119: #{tpu_custom_call.1} parent=79 // pred_region
          %814 = dma.done %s807, 256
        $region120: #{tpu_custom_call.1} parent=79 // pred_fallthru
          _
        %s815 = sand.u32 %s47, 1
        %s816 = scalar_lea.sflag [#allocation19], %s815
        %s817 = sand.u32 %s317, 1
        %s818 = scalar_lea.vmem [#allocation20], %s817
        // Predicated region
        $region121: #{tpu_custom_call.1} parent=79 // pred_check
          %p819 = pneg %p330
        $region122: #{tpu_custom_call.1} parent=79 // pred_check_branch
          %821 = sbr.rel (%p819) target = $region124
        $region123: #{tpu_custom_call.1} parent=79 // pred_region
          %822 = dma.done %s816, 16
        $region124: #{tpu_custom_call.1} parent=79 // pred_fallthru
          _
        %s823 = sand.u32 %s47, 1
        %s824 = scalar_lea.sflag [#allocation22], %s823
        %s825 = sand.u32 %s343, 1
        %s826 = smul.addr %s825, 64
        %s827 = scalar_lea.vmem [#allocation21], %s826
        // Predicated region
        $region125: #{tpu_custom_call.1} parent=79 // pred_check
          %p828 = pneg %p356
        $region126: #{tpu_custom_call.1} parent=79 // pred_check_branch
          %830 = sbr.rel (%p828) target = $region128
        $region127: #{tpu_custom_call.1} parent=79 // pred_region
          %831 = dma.done %s824, 1024
        $region128: #{tpu_custom_call.1} parent=79 // pred_fallthru
          _
        %s832 = sand.u32 %s47, 1
        %s833 = scalar_lea.sflag [#allocation22], %s832
        %s834 = sand.u32 %s369, 1
        %s835 = scalar_lea.vmem [#allocation23], %s834
        // Predicated region
        $region129: #{tpu_custom_call.1} parent=79 // pred_check
          %p836 = pneg %p382
        $region130: #{tpu_custom_call.1} parent=79 // pred_check_branch
          %838 = sbr.rel (%p836) target = $region132
        $region131: #{tpu_custom_call.1} parent=79 // pred_region
          %839 = dma.done %s833, 16
        $region132: #{tpu_custom_call.1} parent=79 // pred_fallthru
          _
        %s840 = sand.u32 %s47, 1
        %s841 = scalar_lea.sflag [#allocation25], %s840
        %s842 = sand.u32 %s395, 1
        %s843 = scalar_lea.vmem [#allocation24], %s842
        // Predicated region
        $region133: #{tpu_custom_call.1} parent=79 // pred_check
          %p844 = pneg %p408
        $region134: #{tpu_custom_call.1} parent=79 // pred_check_branch
          %846 = sbr.rel (%p844) target = $region136
        $region135: #{tpu_custom_call.1} parent=79 // pred_region
          %847 = dma.done %s841, 16
        $region136: #{tpu_custom_call.1} parent=79 // pred_fallthru
          _
        %s848 = sand.u32 %s47, 1
        %s849 = scalar_lea.sflag [#allocation25], %s848
        %s850 = sand.u32 %s421, 1
        %s851 = scalar_lea.vmem [#allocation26], %s850
        // Predicated region
        $region137: #{tpu_custom_call.1} parent=79 // pred_check
          %p852 = pneg %p434
        $region138: #{tpu_custom_call.1} parent=79 // pred_check_branch
          %854 = sbr.rel (%p852) target = $region140
        $region139: #{tpu_custom_call.1} parent=79 // pred_region
          %855 = dma.done %s849, 16
        $region140: #{tpu_custom_call.1} parent=79 // pred_fallthru
          _
        %p856 = pneg %p80
        %p857 = pneg %p77
        %p858 = pneg %p101
        %p859 = pneg %p98
        %p860 = pneg %p122
        %p861 = pneg %p119
        %s862 = sand.u32 %s47, 1
        %s863 = scalar_lea.sflag [#allocation10], %s862
        %s864 = sand.u32 %s135, 1
        %s865 = smul.addr %s864, 16
        %s866 = scalar_lea.vmem [#allocation9], %s865
        %p867 = pneg %p148
        %p868 = pneg %p145
        %s869 = sand.u32 %s47, 1
        %s870 = scalar_lea.sflag [#allocation10], %s869
        %s871 = sand.u32 %s161, 1
        %s872 = scalar_lea.vmem [#allocation11], %s871
        %p873 = pneg %p174
        %p874 = pneg %p171
        %s875 = sand.u32 %s47, 1
        %s876 = scalar_lea.sflag [#allocation13], %s875
        %s877 = sand.u32 %s187, 1
        %s878 = smul.addr %s877, 16
        %s879 = scalar_lea.vmem [#allocation12], %s878
        %p880 = pneg %p200
        %p881 = pneg %p197
        %s882 = sand.u32 %s47, 1
        %s883 = scalar_lea.sflag [#allocation13], %s882
        %s884 = sand.u32 %s213, 1
        %s885 = scalar_lea.vmem [#allocation14], %s884
        %p886 = pneg %p226
        %p887 = pneg %p223
        %s888 = sand.u32 %s47, 1
        %s889 = scalar_lea.sflag [#allocation16], %s888
        %s890 = sand.u32 %s239, 1
        %s891 = scalar_lea.vmem [#allocation15], %s890
        %p892 = pneg %p252
        %p893 = pneg %p249
        %s894 = sand.u32 %s47, 1
        %s895 = scalar_lea.sflag [#allocation16], %s894
        %s896 = sand.u32 %s265, 1
        %s897 = scalar_lea.vmem [#allocation17], %s896
        %p898 = pneg %p278
        %p899 = pneg %p275
        %s900 = sand.u32 %s47, 1
        %s901 = scalar_lea.sflag [#allocation19], %s900
        %s902 = sand.u32 %s291, 1
        %s903 = smul.addr %s902, 16
        %s904 = scalar_lea.vmem [#allocation18], %s903
        %p905 = pneg %p304
        %p906 = pneg %p301
        %s907 = sand.u32 %s47, 1
        %s908 = scalar_lea.sflag [#allocation19], %s907
        %s909 = sand.u32 %s317, 1
        %s910 = scalar_lea.vmem [#allocation20], %s909
        %p911 = pneg %p330
        %p912 = pneg %p327
        %s913 = sand.u32 %s47, 1
        %s914 = scalar_lea.sflag [#allocation22], %s913
        %s915 = sand.u32 %s343, 1
        %s916 = smul.addr %s915, 64
        %s917 = scalar_lea.vmem [#allocation21], %s916
        %p918 = pneg %p356
        %p919 = pneg %p353
        %s920 = sand.u32 %s47, 1
        %s921 = scalar_lea.sflag [#allocation22], %s920
        %s922 = sand.u32 %s369, 1
        %s923 = scalar_lea.vmem [#allocation23], %s922
        %p924 = pneg %p382
        %p925 = pneg %p379
        %s926 = sand.u32 %s47, 1
        %s927 = scalar_lea.sflag [#allocation25], %s926
        %s928 = sand.u32 %s395, 1
        %s929 = scalar_lea.vmem [#allocation24], %s928
        %p930 = pneg %p408
        %p931 = pneg %p405
        %s932 = sand.u32 %s47, 1
        %s933 = scalar_lea.sflag [#allocation25], %s932
        %s934 = sand.u32 %s421, 1
        %s935 = scalar_lea.vmem [#allocation26], %s934
        %p936 = pneg %p434
        %p937 = pneg %p431
        %p938 = pneg %p460
        %p939 = pneg %p457
        %s940 = smul.u32 2, %s51
        %p942 = scmp.eq.s32.totalorder %s52, 0
        // Predicated region
        $region141: #{tpu_custom_call.1} parent=79 // pred_check
          %p943 = pneg %p942
        $region142: #{tpu_custom_call.1} parent=79 // pred_check_branch
          %945 = sbr.rel (%p943) target = $region144
        $region143: #{tpu_custom_call.1} parent=79 // pred_region
          %v946 = vld [vmem:[#allocation3] sm:$0xff]
          %v947 = vld [vmem:[#allocation3 + $0x8] sm:$0xff]
          %v948 = vpack.c.bf16 %v947, %v946
          %v949 = vld [vmem:[#allocation6] sm:$0xf]
          %v950 = vld [vmem:[#allocation8] sm:$0x1]
          %v952 = vlaneseq
          %v953 = vshrl.u32 %v952, 7
          %v954 = vsub.s32 0, %v953
          %v955 = vrot.slane %v950, %v954
          %vm957 = vcmask 64512
          %v959 = vsel %vm957, %v948, 0
          %vm961 = vcmask 1043456
          %v963 = vsel %vm961, %v949, 0
          %965 = vmatprep.subr.bf16.mxu0 0
          %966 = vmatpush1.bf16.msra.mxu0 %v963
          %967 = vmatprep.subr.bf16.mxu0 0
          %968 = vmatpush1.bf16.msra.mxu0 0
          %969 = vmatprep.subr.bf16.mxu0 0
          %970 = vmatpush1.bf16.msra.mxu0 0
          %971 = vmatprep.subr.bf16.mxu0 0
          %972 = vmatpush1.bf16.msra.mxu0 0
          %973 = vmatprep.subr.bf16.mxu0 0
          %974 = vmatpush1.bf16.msra.mxu0 0
          %975 = vmatprep.subr.bf16.mxu0 0
          %976 = vmatpush1.bf16.msra.mxu0 0
          %977 = vmatprep.subr.bf16.mxu0 0
          %978 = vmatpush1.bf16.msra.mxu0 0
          %979 = vmatprep.subr.bf16.mxu0 0
          %980 = vmatpush1.bf16.msra.mxu0 0
          %981 = vmatprep.subr.bf16.mxu0 0
          %982 = vmatpush1.bf16.msra.mxu0 0
          %983 = vmatprep.subr.bf16.mxu0 0
          %984 = vmatpush1.bf16.msra.mxu0 0
          %985 = vmatprep.subr.bf16.mxu0 0
          %986 = vmatpush1.bf16.msra.mxu0 0
          %987 = vmatprep.subr.bf16.mxu0 0
          %988 = vmatpush1.bf16.msra.mxu0 0
          %989 = vmatprep.subr.bf16.mxu0 0
          %990 = vmatpush1.bf16.msra.mxu0 0
          %991 = vmatprep.subr.bf16.mxu0 0
          %992 = vmatpush1.bf16.msra.mxu0 0
          %993 = vmatprep.subr.bf16.mxu0 0
          %994 = vmatpush1.bf16.msra.mxu0 0
          %995 = vmatprep.subr.bf16.mxu0 0
          %996 = vmatpush1.bf16.msra.mxu0 0
          %997 = vmatprep.mubr.bf16.mxu0 0
          %998 = vmatmul.mubr.bf16.gmra.mrb[0].mxu0 %v959
          %v999 = vpop.f32.mrb[0].mxu0
          %v1000 = vadd.f32 %v955, %v999
          %v1001 = vpop.f32.mrb[0].mxu0
          %v1002 = vpop.f32.mrb[0].mxu0
          %v1003 = vadd.f32 %v955, %v1002
          %v1004 = vpop.f32.mrb[0].mxu0
          %1005 = vdwg.mxu0
          %vm1006 = vcmask 261120
          %1007 = vst.msk [vmem:[#allocation2] sm:$0xff] %vm1006, %v1000
          %1008 = vst.msk [vmem:[#allocation2 + $0x8] sm:$0xff] %vm1006, %v1003
        $region144: #{tpu_custom_call.1} parent=79 // pred_fallthru
          _
        %v1009 = vld [vmem:[#allocation2] sm:$0xff]
        %v1010 = vld [vmem:[#allocation2 + $0x8] sm:$0xff]
        %v1011 = vpack.c.bf16 %v1010, %v1009
        %v1012 = vld [vmem:[%s760] sm:$0xf]
        %v1013 = vld [vmem:[%s760 + $0x4] sm:$0xf]
        %v1014 = vld [vmem:[%s760 + $0x8] sm:$0xf]
        %v1015 = vld [vmem:[%s760 + $0xc] sm:$0xf]
        %v1016 = vld [vmem:[%s768] sm:$0x1]
        %v1018 = vlaneseq
        %v1019 = vshrl.u32 %v1018, 7
        %v1020 = vsub.s32 0, %v1019
        %v1021 = vrot.slane %v1016, %v1020
        %v1027 = vunpack.c.l.b16 %v1012
        %v1028 = vunpack.c.l.b16 %v1013
        %v1029 = vunpack.c.l.b16 %v1014
        %v1030 = vunpack.c.l.b16 %v1015
        %v1031 = vpack.c.b16 %v1028, %v1027
        %v1032 = vpack.c.b16 %v1030, %v1029
        %vm1035 = vcmask 261120
        %v1037 = vsel %vm1035, %v1011, 0
        %1039 = vmatprep.subr.bf16.mxu0 0
        %1040 = vmatpush1.bf16.msra.mxu0 %v1031
        %1041 = vmatprep.subr.bf16.mxu0 0
        %1042 = vmatpush1.bf16.msra.mxu0 %v1032
        %1043 = vmatprep.subr.bf16.mxu0 0
        %1044 = vmatpush1.bf16.msra.mxu0 0
        %1045 = vmatprep.subr.bf16.mxu0 0
        %1046 = vmatpush1.bf16.msra.mxu0 0
        %1047 = vmatprep.subr.bf16.mxu0 0
        %1048 = vmatpush1.bf16.msra.mxu0 0
        %1049 = vmatprep.subr.bf16.mxu0 0
        %1050 = vmatpush1.bf16.msra.mxu0 0
        %1051 = vmatprep.subr.bf16.mxu0 0
        %1052 = vmatpush1.bf16.msra.mxu0 0
        %1053 = vmatprep.subr.bf16.mxu0 0
        %1054 = vmatpush1.bf16.msra.mxu0 0
        %1055 = vmatprep.subr.bf16.mxu0 0
        %1056 = vmatpush1.bf16.msra.mxu0 0
        %1057 = vmatprep.subr.bf16.mxu0 0
        %1058 = vmatpush1.bf16.msra.mxu0 0
        %1059 = vmatprep.subr.bf16.mxu0 0
        %1060 = vmatpush1.bf16.msra.mxu0 0
        %1061 = vmatprep.subr.bf16.mxu0 0
        %1062 = vmatpush1.bf16.msra.mxu0 0
        %1063 = vmatprep.subr.bf16.mxu0 0
        %1064 = vmatpush1.bf16.msra.mxu0 0
        %1065 = vmatprep.subr.bf16.mxu0 0
        %1066 = vmatpush1.bf16.msra.mxu0 0
        %1067 = vmatprep.subr.bf16.mxu0 0
        %1068 = vmatpush1.bf16.msra.mxu0 0
        %1069 = vmatprep.subr.bf16.mxu0 0
        %1070 = vmatpush1.bf16.msra.mxu0 0
        %1071 = vmatprep.mubr.bf16.mxu0 0
        %1072 = vmatmul.mubr.bf16.gmra.mrb[0].mxu0 %v1037
        %v1073 = vpop.f32.mrb[0].mxu0
        %v1074 = vadd.f32 %v1021, %v1073
        %v1075 = vpop.f32.mrb[0].mxu0
        %v1076 = vpop.f32.mrb[0].mxu0
        %v1077 = vadd.f32 %v1021, %v1076
        %v1078 = vpop.f32.mrb[0].mxu0
        %1079 = vdwg.mxu0
        %v1080 = vpack.c.bf16 %v1074, %v1074
        %v1081 = vpack.c.bf16 %v1077, %v1077
        %1083 = vrot.lane.b32.xlu0 %v1080, 96
        %v1084 = vpop.permute.xlu0 %1083
        %vm1085 = vcmask 64512
        %v1087 = vsel %vm1085, %v1080, 0
        %v1090 = vsel %vm1085, %v1084, 0
        %1092 = vmatprep.subr.bf16.mxu0 0
        %1093 = vmatpush1.bf16.xpose.msra.mxu0 %v1090
        %1094 = vmatprep.subr.bf16.mxu0 0
        %1095 = vmatpush1.bf16.xpose.msra.mxu0 0
        %1096 = vmatprep.subr.bf16.mxu0 0
        %1097 = vmatpush1.bf16.xpose.msra.mxu0 0
        %1098 = vmatprep.subr.bf16.mxu0 0
        %1099 = vmatpush1.bf16.xpose.msra.mxu0 0
        %1100 = vmatprep.subr.bf16.mxu0 0
        %1101 = vmatpush1.bf16.xpose.msra.mxu0 0
        %1102 = vmatprep.subr.bf16.mxu0 0
        %1103 = vmatpush1.bf16.xpose.msra.mxu0 0
        %1104 = vmatprep.subr.bf16.mxu0 0
        %1105 = vmatpush1.bf16.xpose.msra.mxu0 0
        %1106 = vmatprep.subr.bf16.mxu0 0
        %1107 = vmatpush1.bf16.xpose.msra.mxu0 0
        %1108 = vmatprep.subr.bf16.mxu0 0
        %1109 = vmatpush1.bf16.xpose.msra.mxu0 0
        %1110 = vmatprep.subr.bf16.mxu0 0
        %1111 = vmatpush1.bf16.xpose.msra.mxu0 0
        %1112 = vmatprep.subr.bf16.mxu0 0
        %1113 = vmatpush1.bf16.xpose.msra.mxu0 0
        %1114 = vmatprep.subr.bf16.mxu0 0
        %1115 = vmatpush1.bf16.xpose.msra.mxu0 0
        %1116 = vmatprep.subr.bf16.mxu0 0
        %1117 = vmatpush1.bf16.xpose.msra.mxu0 0
        %1118 = vmatprep.subr.bf16.mxu0 0
        %1119 = vmatpush1.bf16.xpose.msra.mxu0 0
        %1120 = vmatprep.subr.bf16.mxu0 0
        %1121 = vmatpush1.bf16.xpose.msra.mxu0 0
        %1122 = vmatprep.subr.bf16.mxu0 0
        %1123 = vmatpush1.bf16.xpose.msra.mxu0 0
        %1124 = vmatprep.mubr.bf16.mxu0 0
        %1125 = vmatmul.mubr.bf16.gmra.mrb[0].mxu0 %v1087
        %v1126 = vpop.f32.mrb[0].mxu0
        %v1127 = vadd.f32 0.0, %v1126
        %v1128 = vpop.f32.mrb[0].mxu0
        %v1129 = vpop.f32.mrb[0].mxu0
        %v1130 = vpop.f32.mrb[0].mxu0
        %1131 = vdwg.mxu0
        %1133 = vrot.lane.b32.xlu0 %v1081, 96
        %v1134 = vpop.permute.xlu0 %1133
        %v1136 = vsel %vm1085, %v1081, 0
        %v1139 = vsel %vm1085, %v1134, 0
        %1141 = vmatprep.subr.bf16.mxu0 0
        %1142 = vmatpush1.bf16.xpose.msra.mxu0 %v1139
        %1143 = vmatprep.subr.bf16.mxu0 0
        %1144 = vmatpush1.bf16.xpose.msra.mxu0 0
        %1145 = vmatprep.subr.bf16.mxu0 0
        %1146 = vmatpush1.bf16.xpose.msra.mxu0 0
        %1147 = vmatprep.subr.bf16.mxu0 0
        %1148 = vmatpush1.bf16.xpose.msra.mxu0 0
        %1149 = vmatprep.subr.bf16.mxu0 0
        %1150 = vmatpush1.bf16.xpose.msra.mxu0 0
        %1151 = vmatprep.subr.bf16.mxu0 0
        %1152 = vmatpush1.bf16.xpose.msra.mxu0 0
        %1153 = vmatprep.subr.bf16.mxu0 0
        %1154 = vmatpush1.bf16.xpose.msra.mxu0 0
        %1155 = vmatprep.subr.bf16.mxu0 0
        %1156 = vmatpush1.bf16.xpose.msra.mxu0 0
        %1157 = vmatprep.subr.bf16.mxu0 0
        %1158 = vmatpush1.bf16.xpose.msra.mxu0 0
        %1159 = vmatprep.subr.bf16.mxu0 0
        %1160 = vmatpush1.bf16.xpose.msra.mxu0 0
        %1161 = vmatprep.subr.bf16.mxu0 0
        %1162 = vmatpush1.bf16.xpose.msra.mxu0 0
        %1163 = vmatprep.subr.bf16.mxu0 0
        %1164 = vmatpush1.bf16.xpose.msra.mxu0 0
        %1165 = vmatprep.subr.bf16.mxu0 0
        %1166 = vmatpush1.bf16.xpose.msra.mxu0 0
        %1167 = vmatprep.subr.bf16.mxu0 0
        %1168 = vmatpush1.bf16.xpose.msra.mxu0 0
        %1169 = vmatprep.subr.bf16.mxu0 0
        %1170 = vmatpush1.bf16.xpose.msra.mxu0 0
        %1171 = vmatprep.subr.bf16.mxu0 0
        %1172 = vmatpush1.bf16.xpose.msra.mxu0 0
        %1173 = vmatprep.mubr.bf16.mxu0 0
        %1174 = vmatmul.mubr.bf16.gmra.mrb[0].mxu0 %v1136
        %v1175 = vpop.f32.mrb[0].mxu0
        %v1176 = vadd.f32 0.0, %v1175
        %v1177 = vpop.f32.mrb[0].mxu0
        %v1178 = vpop.f32.mrb[0].mxu0
        %v1179 = vpop.f32.mrb[0].mxu0
        %1180 = vdwg.mxu0
        %v1181 = vsel %vm1085, %v1127, -inf
        %1182 = vmax.xlane.f32.xlu0 %v1181
        %v1183 = vpop.xlane.xlu0 %1182
        %v1184 = vsel %vm1085, %v1176, -inf
        %1185 = vmax.xlane.f32.xlu0 %v1184
        %v1186 = vpop.xlane.xlu0 %1185
        %v1187 = vsub.f32 %v1127, %v1183
        %v1188 = vsub.f32 %v1176, %v1186
        %v1189 = vmul.f32 %v1187, 1.442695
        %v1190 = vpow.pop %v1189
        %v1191 = vmul.f32 %v1188, 1.442695
        %v1192 = vpow.pop %v1191
        %v1193 = vsel %vm1085, %v1190, 0.0
        %1194 = vadd.xlane.f32.xlu0 %v1193
        %v1195 = vpop.xlane.xlu0 %1194
        %v1196 = vsel %vm1085, %v1192, 0.0
        %1197 = vadd.xlane.f32.xlu0 %v1196
        %v1198 = vpop.xlane.xlu0 %1197
        %v1199 = vrcp.pop %v1195
        %v1200 = vrcp.pop %v1198
        %v1201 = vmul.f32 %v1190, %v1199
        %v1202 = vmul.f32 %v1192, %v1200
        %v1203 = vpack.c.bf16 %v1201, %v1201
        %v1204 = vpack.c.bf16 %v1202, %v1202
        %1205 = vrot.lane.b32.xlu0 %v1080, 64
        %v1206 = vpop.permute.xlu0 %1205
        %v1208 = vsel %vm1085, %v1203, 0
        %vm1210 = vcmask 1043456
        %v1212 = vsel %vm1210, %v1206, 0
        %1214 = vmatprep.subr.bf16.mxu0 0
        %1215 = vmatpush1.bf16.msra.mxu0 %v1212
        %1216 = vmatprep.subr.bf16.mxu0 0
        %1217 = vmatpush1.bf16.msra.mxu0 0
        %1218 = vmatprep.subr.bf16.mxu0 0
        %1219 = vmatpush1.bf16.msra.mxu0 0
        %1220 = vmatprep.subr.bf16.mxu0 0
        %1221 = vmatpush1.bf16.msra.mxu0 0
        %1222 = vmatprep.subr.bf16.mxu0 0
        %1223 = vmatpush1.bf16.msra.mxu0 0
        %1224 = vmatprep.subr.bf16.mxu0 0
        %1225 = vmatpush1.bf16.msra.mxu0 0
        %1226 = vmatprep.subr.bf16.mxu0 0
        %1227 = vmatpush1.bf16.msra.mxu0 0
        %1228 = vmatprep.subr.bf16.mxu0 0
        %1229 = vmatpush1.bf16.msra.mxu0 0
        %1230 = vmatprep.subr.bf16.mxu0 0
        %1231 = vmatpush1.bf16.msra.mxu0 0
        %1232 = vmatprep.subr.bf16.mxu0 0
        %1233 = vmatpush1.bf16.msra.mxu0 0
        %1234 = vmatprep.subr.bf16.mxu0 0
        %1235 = vmatpush1.bf16.msra.mxu0 0
        %1236 = vmatprep.subr.bf16.mxu0 0
        %1237 = vmatpush1.bf16.msra.mxu0 0
        %1238 = vmatprep.subr.bf16.mxu0 0
        %1239 = vmatpush1.bf16.msra.mxu0 0
        %1240 = vmatprep.subr.bf16.mxu0 0
        %1241 = vmatpush1.bf16.msra.mxu0 0
        %1242 = vmatprep.subr.bf16.mxu0 0
        %1243 = vmatpush1.bf16.msra.mxu0 0
        %1244 = vmatprep.subr.bf16.mxu0 0
        %1245 = vmatpush1.bf16.msra.mxu0 0
        %1246 = vmatprep.mubr.bf16.mxu0 0
        %1247 = vmatmul.mubr.bf16.gmra.mrb[0].mxu0 %v1208
        %v1248 = vpop.f32.mrb[0].mxu0
        %v1249 = vadd.f32 0.0, %v1248
        %v1250 = vpop.f32.mrb[0].mxu0
        %v1251 = vpop.f32.mrb[0].mxu0
        %v1252 = vpop.f32.mrb[0].mxu0
        %1253 = vdwg.mxu0
        %1254 = vrot.lane.b32.xlu0 %v1081, 64
        %v1255 = vpop.permute.xlu0 %1254
        %v1257 = vsel %vm1085, %v1204, 0
        %v1260 = vsel %vm1210, %v1255, 0
        %1262 = vmatprep.subr.bf16.mxu0 0
        %1263 = vmatpush1.bf16.msra.mxu0 %v1260
        %1264 = vmatprep.subr.bf16.mxu0 0
        %1265 = vmatpush1.bf16.msra.mxu0 0
        %1266 = vmatprep.subr.bf16.mxu0 0
        %1267 = vmatpush1.bf16.msra.mxu0 0
        %1268 = vmatprep.subr.bf16.mxu0 0
        %1269 = vmatpush1.bf16.msra.mxu0 0
        %1270 = vmatprep.subr.bf16.mxu0 0
        %1271 = vmatpush1.bf16.msra.mxu0 0
        %1272 = vmatprep.subr.bf16.mxu0 0
        %1273 = vmatpush1.bf16.msra.mxu0 0
        %1274 = vmatprep.subr.bf16.mxu0 0
        %1275 = vmatpush1.bf16.msra.mxu0 0
        %1276 = vmatprep.subr.bf16.mxu0 0
        %1277 = vmatpush1.bf16.msra.mxu0 0
        %1278 = vmatprep.subr.bf16.mxu0 0
        %1279 = vmatpush1.bf16.msra.mxu0 0
        %1280 = vmatprep.subr.bf16.mxu0 0
        %1281 = vmatpush1.bf16.msra.mxu0 0
        %1282 = vmatprep.subr.bf16.mxu0 0
        %1283 = vmatpush1.bf16.msra.mxu0 0
        %1284 = vmatprep.subr.bf16.mxu0 0
        %1285 = vmatpush1.bf16.msra.mxu0 0
        %1286 = vmatprep.subr.bf16.mxu0 0
        %1287 = vmatpush1.bf16.msra.mxu0 0
        %1288 = vmatprep.subr.bf16.mxu0 0
        %1289 = vmatpush1.bf16.msra.mxu0 0
        %1290 = vmatprep.subr.bf16.mxu0 0
        %1291 = vmatpush1.bf16.msra.mxu0 0
        %1292 = vmatprep.subr.bf16.mxu0 0
        %1293 = vmatpush1.bf16.msra.mxu0 0
        %1294 = vmatprep.mubr.bf16.mxu0 0
        %1295 = vmatmul.mubr.bf16.gmra.mrb[0].mxu0 %v1257
        %v1296 = vpop.f32.mrb[0].mxu0
        %v1297 = vadd.f32 0.0, %v1296
        %v1298 = vpop.f32.mrb[0].mxu0
        %v1299 = vpop.f32.mrb[0].mxu0
        %v1300 = vpop.f32.mrb[0].mxu0
        %1301 = vdwg.mxu0
        %1302 = vrot.lane.b32.xlu0 %v1080, 120
        %v1303 = vpop.permute.xlu0 %1302
        %1304 = vrot.lane.b32.xlu0 %v1080, 88
        %v1305 = vpop.permute.xlu0 %1304
        %v1307 = vsel %vm1085, %v1303, 0
        %v1310 = vsel %vm1085, %v1305, 0
        %1312 = vmatprep.subr.bf16.mxu0 0
        %1313 = vmatpush1.bf16.xpose.msra.mxu0 %v1310
        %1314 = vmatprep.subr.bf16.mxu0 0
        %1315 = vmatpush1.bf16.xpose.msra.mxu0 0
        %1316 = vmatprep.subr.bf16.mxu0 0
        %1317 = vmatpush1.bf16.xpose.msra.mxu0 0
        %1318 = vmatprep.subr.bf16.mxu0 0
        %1319 = vmatpush1.bf16.xpose.msra.mxu0 0
        %1320 = vmatprep.subr.bf16.mxu0 0
        %1321 = vmatpush1.bf16.xpose.msra.mxu0 0
        %1322 = vmatprep.subr.bf16.mxu0 0
        %1323 = vmatpush1.bf16.xpose.msra.mxu0 0
        %1324 = vmatprep.subr.bf16.mxu0 0
        %1325 = vmatpush1.bf16.xpose.msra.mxu0 0
        %1326 = vmatprep.subr.bf16.mxu0 0
        %1327 = vmatpush1.bf16.xpose.msra.mxu0 0
        %1328 = vmatprep.subr.bf16.mxu0 0
        %1329 = vmatpush1.bf16.xpose.msra.mxu0 0
        %1330 = vmatprep.subr.bf16.mxu0 0
        %1331 = vmatpush1.bf16.xpose.msra.mxu0 0
        %1332 = vmatprep.subr.bf16.mxu0 0
        %1333 = vmatpush1.bf16.xpose.msra.mxu0 0
        %1334 = vmatprep.subr.bf16.mxu0 0
        %1335 = vmatpush1.bf16.xpose.msra.mxu0 0
        %1336 = vmatprep.subr.bf16.mxu0 0
        %1337 = vmatpush1.bf16.xpose.msra.mxu0 0
        %1338 = vmatprep.subr.bf16.mxu0 0
        %1339 = vmatpush1.bf16.xpose.msra.mxu0 0
        %1340 = vmatprep.subr.bf16.mxu0 0
        %1341 = vmatpush1.bf16.xpose.msra.mxu0 0
        %1342 = vmatprep.subr.bf16.mxu0 0
        %1343 = vmatpush1.bf16.xpose.msra.mxu0 0
        %1344 = vmatprep.mubr.bf16.mxu0 0
        %1345 = vmatmul.mubr.bf16.gmra.mrb[0].mxu0 %v1307
        %v1346 = vpop.f32.mrb[0].mxu0
        %v1347 = vadd.f32 0.0, %v1346
        %v1348 = vpop.f32.mrb[0].mxu0
        %v1349 = vpop.f32.mrb[0].mxu0
        %v1350 = vpop.f32.mrb[0].mxu0
        %1351 = vdwg.mxu0
        %1352 = vrot.lane.b32.xlu0 %v1081, 120
        %v1353 = vpop.permute.xlu0 %1352
        %1354 = vrot.lane.b32.xlu0 %v1081, 88
        %v1355 = vpop.permute.xlu0 %1354
        %v1357 = vsel %vm1085, %v1353, 0
        %v1360 = vsel %vm1085, %v1355, 0
        %1362 = vmatprep.subr.bf16.mxu0 0
        %1363 = vmatpush1.bf16.xpose.msra.mxu0 %v1360
        %1364 = vmatprep.subr.bf16.mxu0 0
        %1365 = vmatpush1.bf16.xpose.msra.mxu0 0
        %1366 = vmatprep.subr.bf16.mxu0 0
        %1367 = vmatpush1.bf16.xpose.msra.mxu0 0
        %1368 = vmatprep.subr.bf16.mxu0 0
        %1369 = vmatpush1.bf16.xpose.msra.mxu0 0
        %1370 = vmatprep.subr.bf16.mxu0 0
        %1371 = vmatpush1.bf16.xpose.msra.mxu0 0
        %1372 = vmatprep.subr.bf16.mxu0 0
        %1373 = vmatpush1.bf16.xpose.msra.mxu0 0
        %1374 = vmatprep.subr.bf16.mxu0 0
        %1375 = vmatpush1.bf16.xpose.msra.mxu0 0
        %1376 = vmatprep.subr.bf16.mxu0 0
        %1377 = vmatpush1.bf16.xpose.msra.mxu0 0
        %1378 = vmatprep.subr.bf16.mxu0 0
        %1379 = vmatpush1.bf16.xpose.msra.mxu0 0
        %1380 = vmatprep.subr.bf16.mxu0 0
        %1381 = vmatpush1.bf16.xpose.msra.mxu0 0
        %1382 = vmatprep.subr.bf16.mxu0 0
        %1383 = vmatpush1.bf16.xpose.msra.mxu0 0
        %1384 = vmatprep.subr.bf16.mxu0 0
        %1385 = vmatpush1.bf16.xpose.msra.mxu0 0
        %1386 = vmatprep.subr.bf16.mxu0 0
        %1387 = vmatpush1.bf16.xpose.msra.mxu0 0
        %1388 = vmatprep.subr.bf16.mxu0 0
        %1389 = vmatpush1.bf16.xpose.msra.mxu0 0
        %1390 = vmatprep.subr.bf16.mxu0 0
        %1391 = vmatpush1.bf16.xpose.msra.mxu0 0
        %1392 = vmatprep.subr.bf16.mxu0 0
        %1393 = vmatpush1.bf16.xpose.msra.mxu0 0
        %1394 = vmatprep.mubr.bf16.mxu0 0
        %1395 = vmatmul.mubr.bf16.gmra.mrb[0].mxu0 %v1357
        %v1396 = vpop.f32.mrb[0].mxu0
        %v1397 = vadd.f32 0.0, %v1396
        %v1398 = vpop.f32.mrb[0].mxu0
        %v1399 = vpop.f32.mrb[0].mxu0
        %v1400 = vpop.f32.mrb[0].mxu0
        %1401 = vdwg.mxu0
        %v1402 = vsel %vm1085, %v1347, -inf
        %1403 = vmax.xlane.f32.xlu0 %v1402
        %v1404 = vpop.xlane.xlu0 %1403
        %v1405 = vsel %vm1085, %v1397, -inf
        %1406 = vmax.xlane.f32.xlu0 %v1405
        %v1407 = vpop.xlane.xlu0 %1406
        %v1408 = vsub.f32 %v1347, %v1404
        %v1409 = vsub.f32 %v1397, %v1407
        %v1410 = vmul.f32 %v1408, 1.442695
        %v1411 = vpow.pop %v1410
        %v1412 = vmul.f32 %v1409, 1.442695
        %v1413 = vpow.pop %v1412
        %v1414 = vsel %vm1085, %v1411, 0.0
        %1415 = vadd.xlane.f32.xlu0 %v1414
        %v1416 = vpop.xlane.xlu0 %1415
        %v1417 = vsel %vm1085, %v1413, 0.0
        %1418 = vadd.xlane.f32.xlu0 %v1417
        %v1419 = vpop.xlane.xlu0 %1418
        %v1420 = vrcp.pop %v1416
        %v1421 = vrcp.pop %v1419
        %v1422 = vmul.f32 %v1411, %v1420
        %v1423 = vmul.f32 %v1413, %v1421
        %v1424 = vpack.c.bf16 %v1422, %v1422
        %v1425 = vpack.c.bf16 %v1423, %v1423
        %1426 = vrot.lane.b32.xlu0 %v1080, 56
        %v1427 = vpop.permute.xlu0 %1426
        %v1429 = vsel %vm1085, %v1424, 0
        %v1432 = vsel %vm1210, %v1427, 0
        %1434 = vmatprep.subr.bf16.mxu0 0
        %1435 = vmatpush1.bf16.msra.mxu0 %v1432
        %1436 = vmatprep.subr.bf16.mxu0 0
        %1437 = vmatpush1.bf16.msra.mxu0 0
        %1438 = vmatprep.subr.bf16.mxu0 0
        %1439 = vmatpush1.bf16.msra.mxu0 0
        %1440 = vmatprep.subr.bf16.mxu0 0
        %1441 = vmatpush1.bf16.msra.mxu0 0
        %1442 = vmatprep.subr.bf16.mxu0 0
        %1443 = vmatpush1.bf16.msra.mxu0 0
        %1444 = vmatprep.subr.bf16.mxu0 0
        %1445 = vmatpush1.bf16.msra.mxu0 0
        %1446 = vmatprep.subr.bf16.mxu0 0
        %1447 = vmatpush1.bf16.msra.mxu0 0
        %1448 = vmatprep.subr.bf16.mxu0 0
        %1449 = vmatpush1.bf16.msra.mxu0 0
        %1450 = vmatprep.subr.bf16.mxu0 0
        %1451 = vmatpush1.bf16.msra.mxu0 0
        %1452 = vmatprep.subr.bf16.mxu0 0
        %1453 = vmatpush1.bf16.msra.mxu0 0
        %1454 = vmatprep.subr.bf16.mxu0 0
        %1455 = vmatpush1.bf16.msra.mxu0 0
        %1456 = vmatprep.subr.bf16.mxu0 0
        %1457 = vmatpush1.bf16.msra.mxu0 0
        %1458 = vmatprep.subr.bf16.mxu0 0
        %1459 = vmatpush1.bf16.msra.mxu0 0
        %1460 = vmatprep.subr.bf16.mxu0 0
        %1461 = vmatpush1.bf16.msra.mxu0 0
        %1462 = vmatprep.subr.bf16.mxu0 0
        %1463 = vmatpush1.bf16.msra.mxu0 0
        %1464 = vmatprep.subr.bf16.mxu0 0
        %1465 = vmatpush1.bf16.msra.mxu0 0
        %1466 = vmatprep.mubr.bf16.mxu0 0
        %1467 = vmatmul.mubr.bf16.gmra.mrb[0].mxu0 %v1429
        %v1468 = vpop.f32.mrb[0].mxu0
        %v1469 = vadd.f32 0.0, %v1468
        %v1470 = vpop.f32.mrb[0].mxu0
        %v1471 = vpop.f32.mrb[0].mxu0
        %v1472 = vpop.f32.mrb[0].mxu0
        %1473 = vdwg.mxu0
        %1474 = vrot.lane.b32.xlu0 %v1081, 56
        %v1475 = vpop.permute.xlu0 %1474
        %v1477 = vsel %vm1085, %v1425, 0
        %v1480 = vsel %vm1210, %v1475, 0
        %1482 = vmatprep.subr.bf16.mxu0 0
        %1483 = vmatpush1.bf16.msra.mxu0 %v1480
        %1484 = vmatprep.subr.bf16.mxu0 0
        %1485 = vmatpush1.bf16.msra.mxu0 0
        %1486 = vmatprep.subr.bf16.mxu0 0
        %1487 = vmatpush1.bf16.msra.mxu0 0
        %1488 = vmatprep.subr.bf16.mxu0 0
        %1489 = vmatpush1.bf16.msra.mxu0 0
        %1490 = vmatprep.subr.bf16.mxu0 0
        %1491 = vmatpush1.bf16.msra.mxu0 0
        %1492 = vmatprep.subr.bf16.mxu0 0
        %1493 = vmatpush1.bf16.msra.mxu0 0
        %1494 = vmatprep.subr.bf16.mxu0 0
        %1495 = vmatpush1.bf16.msra.mxu0 0
        %1496 = vmatprep.subr.bf16.mxu0 0
        %1497 = vmatpush1.bf16.msra.mxu0 0
        %1498 = vmatprep.subr.bf16.mxu0 0
        %1499 = vmatpush1.bf16.msra.mxu0 0
        %1500 = vmatprep.subr.bf16.mxu0 0
        %1501 = vmatpush1.bf16.msra.mxu0 0
        %1502 = vmatprep.subr.bf16.mxu0 0
        %1503 = vmatpush1.bf16.msra.mxu0 0
        %1504 = vmatprep.subr.bf16.mxu0 0
        %1505 = vmatpush1.bf16.msra.mxu0 0
        %1506 = vmatprep.subr.bf16.mxu0 0
        %1507 = vmatpush1.bf16.msra.mxu0 0
        %1508 = vmatprep.subr.bf16.mxu0 0
        %1509 = vmatpush1.bf16.msra.mxu0 0
        %1510 = vmatprep.subr.bf16.mxu0 0
        %1511 = vmatpush1.bf16.msra.mxu0 0
        %1512 = vmatprep.subr.bf16.mxu0 0
        %1513 = vmatpush1.bf16.msra.mxu0 0
        %1514 = vmatprep.mubr.bf16.mxu0 0
        %1515 = vmatmul.mubr.bf16.gmra.mrb[0].mxu0 %v1477
        %v1516 = vpop.f32.mrb[0].mxu0
        %v1517 = vadd.f32 0.0, %v1516
        %v1518 = vpop.f32.mrb[0].mxu0
        %v1519 = vpop.f32.mrb[0].mxu0
        %v1520 = vpop.f32.mrb[0].mxu0
        %1521 = vdwg.mxu0
        %1522 = vrot.lane.b32.xlu0 %v1080, 112
        %v1523 = vpop.permute.xlu0 %1522
        %1524 = vrot.lane.b32.xlu0 %v1080, 80
        %v1525 = vpop.permute.xlu0 %1524
        %v1527 = vsel %vm1085, %v1523, 0
        %v1530 = vsel %vm1085, %v1525, 0
        %1532 = vmatprep.subr.bf16.mxu0 0
        %1533 = vmatpush1.bf16.xpose.msra.mxu0 %v1530
        %1534 = vmatprep.subr.bf16.mxu0 0
        %1535 = vmatpush1.bf16.xpose.msra.mxu0 0
        %1536 = vmatprep.subr.bf16.mxu0 0
        %1537 = vmatpush1.bf16.xpose.msra.mxu0 0
        %1538 = vmatprep.subr.bf16.mxu0 0
        %1539 = vmatpush1.bf16.xpose.msra.mxu0 0
        %1540 = vmatprep.subr.bf16.mxu0 0
        %1541 = vmatpush1.bf16.xpose.msra.mxu0 0
        %1542 = vmatprep.subr.bf16.mxu0 0
        %1543 = vmatpush1.bf16.xpose.msra.mxu0 0
        %1544 = vmatprep.subr.bf16.mxu0 0
        %1545 = vmatpush1.bf16.xpose.msra.mxu0 0
        %1546 = vmatprep.subr.bf16.mxu0 0
        %1547 = vmatpush1.bf16.xpose.msra.mxu0 0
        %1548 = vmatprep.subr.bf16.mxu0 0
        %1549 = vmatpush1.bf16.xpose.msra.mxu0 0
        %1550 = vmatprep.subr.bf16.mxu0 0
        %1551 = vmatpush1.bf16.xpose.msra.mxu0 0
        %1552 = vmatprep.subr.bf16.mxu0 0
        %1553 = vmatpush1.bf16.xpose.msra.mxu0 0
        %1554 = vmatprep.subr.bf16.mxu0 0
        %1555 = vmatpush1.bf16.xpose.msra.mxu0 0
        %1556 = vmatprep.subr.bf16.mxu0 0
        %1557 = vmatpush1.bf16.xpose.msra.mxu0 0
        %1558 = vmatprep.subr.bf16.mxu0 0
        %1559 = vmatpush1.bf16.xpose.msra.mxu0 0
        %1560 = vmatprep.subr.bf16.mxu0 0
        %1561 = vmatpush1.bf16.xpose.msra.mxu0 0
        %1562 = vmatprep.subr.bf16.mxu0 0
        %1563 = vmatpush1.bf16.xpose.msra.mxu0 0
        %1564 = vmatprep.mubr.bf16.mxu0 0
        %1565 = vmatmul.mubr.bf16.gmra.mrb[0].mxu0 %v1527
        %v1566 = vpop.f32.mrb[0].mxu0
        %v1567 = vadd.f32 0.0, %v1566
        %v1568 = vpop.f32.mrb[0].mxu0
        %v1569 = vpop.f32.mrb[0].mxu0
        %v1570 = vpop.f32.mrb[0].mxu0
        %1571 = vdwg.mxu0
        %1572 = vrot.lane.b32.xlu0 %v1081, 112
        %v1573 = vpop.permute.xlu0 %1572
        %1574 = vrot.lane.b32.xlu0 %v1081, 80
        %v1575 = vpop.permute.xlu0 %1574
        %v1577 = vsel %vm1085, %v1573, 0
        %v1580 = vsel %vm1085, %v1575, 0
        %1582 = vmatprep.subr.bf16.mxu0 0
        %1583 = vmatpush1.bf16.xpose.msra.mxu0 %v1580
        %1584 = vmatprep.subr.bf16.mxu0 0
        %1585 = vmatpush1.bf16.xpose.msra.mxu0 0
        %1586 = vmatprep.subr.bf16.mxu0 0
        %1587 = vmatpush1.bf16.xpose.msra.mxu0 0
        %1588 = vmatprep.subr.bf16.mxu0 0
        %1589 = vmatpush1.bf16.xpose.msra.mxu0 0
        %1590 = vmatprep.subr.bf16.mxu0 0
        %1591 = vmatpush1.bf16.xpose.msra.mxu0 0
        %1592 = vmatprep.subr.bf16.mxu0 0
        %1593 = vmatpush1.bf16.xpose.msra.mxu0 0
        %1594 = vmatprep.subr.bf16.mxu0 0
        %1595 = vmatpush1.bf16.xpose.msra.mxu0 0
        %1596 = vmatprep.subr.bf16.mxu0 0
        %1597 = vmatpush1.bf16.xpose.msra.mxu0 0
        %1598 = vmatprep.subr.bf16.mxu0 0
        %1599 = vmatpush1.bf16.xpose.msra.mxu0 0
        %1600 = vmatprep.subr.bf16.mxu0 0
        %1601 = vmatpush1.bf16.xpose.msra.mxu0 0
        %1602 = vmatprep.subr.bf16.mxu0 0
        %1603 = vmatpush1.bf16.xpose.msra.mxu0 0
        %1604 = vmatprep.subr.bf16.mxu0 0
        %1605 = vmatpush1.bf16.xpose.msra.mxu0 0
        %1606 = vmatprep.subr.bf16.mxu0 0
        %1607 = vmatpush1.bf16.xpose.msra.mxu0 0
        %1608 = vmatprep.subr.bf16.mxu0 0
        %1609 = vmatpush1.bf16.xpose.msra.mxu0 0
        %1610 = vmatprep.subr.bf16.mxu0 0
        %1611 = vmatpush1.bf16.xpose.msra.mxu0 0
        %1612 = vmatprep.subr.bf16.mxu0 0
        %1613 = vmatpush1.bf16.xpose.msra.mxu0 0
        %1614 = vmatprep.mubr.bf16.mxu0 0
        %1615 = vmatmul.mubr.bf16.gmra.mrb[0].mxu0 %v1577
        %v1616 = vpop.f32.mrb[0].mxu0
        %v1617 = vadd.f32 0.0, %v1616
        %v1618 = vpop.f32.mrb[0].mxu0
        %v1619 = vpop.f32.mrb[0].mxu0
        %v1620 = vpop.f32.mrb[0].mxu0
        %1621 = vdwg.mxu0
        %v1622 = vsel %vm1085, %v1567, -inf
        %1623 = vmax.xlane.f32.xlu0 %v1622
        %v1624 = vpop.xlane.xlu0 %1623
        %v1625 = vsel %vm1085, %v1617, -inf
        %1626 = vmax.xlane.f32.xlu0 %v1625
        %v1627 = vpop.xlane.xlu0 %1626
        %v1628 = vsub.f32 %v1567, %v1624
        %v1629 = vsub.f32 %v1617, %v1627
        %v1630 = vmul.f32 %v1628, 1.442695
        %v1631 = vpow.pop %v1630
        %v1632 = vmul.f32 %v1629, 1.442695
        %v1633 = vpow.pop %v1632
        %v1634 = vsel %vm1085, %v1631, 0.0
        %1635 = vadd.xlane.f32.xlu0 %v1634
        %v1636 = vpop.xlane.xlu0 %1635
        %v1637 = vsel %vm1085, %v1633, 0.0
        %1638 = vadd.xlane.f32.xlu0 %v1637
        %v1639 = vpop.xlane.xlu0 %1638
        %v1640 = vrcp.pop %v1636
        %v1641 = vrcp.pop %v1639
        %v1642 = vmul.f32 %v1631, %v1640
        %v1643 = vmul.f32 %v1633, %v1641
        %v1644 = vpack.c.bf16 %v1642, %v1642
        %v1645 = vpack.c.bf16 %v1643, %v1643
        %1646 = vrot.lane.b32.xlu0 %v1080, 48
        %v1647 = vpop.permute.xlu0 %1646
        %v1649 = vsel %vm1085, %v1644, 0
        %v1652 = vsel %vm1210, %v1647, 0
        %1654 = vmatprep.subr.bf16.mxu0 0
        %1655 = vmatpush1.bf16.msra.mxu0 %v1652
        %1656 = vmatprep.subr.bf16.mxu0 0
        %1657 = vmatpush1.bf16.msra.mxu0 0
        %1658 = vmatprep.subr.bf16.mxu0 0
        %1659 = vmatpush1.bf16.msra.mxu0 0
        %1660 = vmatprep.subr.bf16.mxu0 0
        %1661 = vmatpush1.bf16.msra.mxu0 0
        %1662 = vmatprep.subr.bf16.mxu0 0
        %1663 = vmatpush1.bf16.msra.mxu0 0
        %1664 = vmatprep.subr.bf16.mxu0 0
        %1665 = vmatpush1.bf16.msra.mxu0 0
        %1666 = vmatprep.subr.bf16.mxu0 0
        %1667 = vmatpush1.bf16.msra.mxu0 0
        %1668 = vmatprep.subr.bf16.mxu0 0
        %1669 = vmatpush1.bf16.msra.mxu0 0
        %1670 = vmatprep.subr.bf16.mxu0 0
        %1671 = vmatpush1.bf16.msra.mxu0 0
        %1672 = vmatprep.subr.bf16.mxu0 0
        %1673 = vmatpush1.bf16.msra.mxu0 0
        %1674 = vmatprep.subr.bf16.mxu0 0
        %1675 = vmatpush1.bf16.msra.mxu0 0
        %1676 = vmatprep.subr.bf16.mxu0 0
        %1677 = vmatpush1.bf16.msra.mxu0 0
        %1678 = vmatprep.subr.bf16.mxu0 0
        %1679 = vmatpush1.bf16.msra.mxu0 0
        %1680 = vmatprep.subr.bf16.mxu0 0
        %1681 = vmatpush1.bf16.msra.mxu0 0
        %1682 = vmatprep.subr.bf16.mxu0 0
        %1683 = vmatpush1.bf16.msra.mxu0 0
        %1684 = vmatprep.subr.bf16.mxu0 0
        %1685 = vmatpush1.bf16.msra.mxu0 0
        %1686 = vmatprep.mubr.bf16.mxu0 0
        %1687 = vmatmul.mubr.bf16.gmra.mrb[0].mxu0 %v1649
        %v1688 = vpop.f32.mrb[0].mxu0
        %v1689 = vadd.f32 0.0, %v1688
        %v1690 = vpop.f32.mrb[0].mxu0
        %v1691 = vpop.f32.mrb[0].mxu0
        %v1692 = vpop.f32.mrb[0].mxu0
        %1693 = vdwg.mxu0
        %1694 = vrot.lane.b32.xlu0 %v1081, 48
        %v1695 = vpop.permute.xlu0 %1694
        %v1697 = vsel %vm1085, %v1645, 0
        %v1700 = vsel %vm1210, %v1695, 0
        %1702 = vmatprep.subr.bf16.mxu0 0
        %1703 = vmatpush1.bf16.msra.mxu0 %v1700
        %1704 = vmatprep.subr.bf16.mxu0 0
        %1705 = vmatpush1.bf16.msra.mxu0 0
        %1706 = vmatprep.subr.bf16.mxu0 0
        %1707 = vmatpush1.bf16.msra.mxu0 0
        %1708 = vmatprep.subr.bf16.mxu0 0
        %1709 = vmatpush1.bf16.msra.mxu0 0
        %1710 = vmatprep.subr.bf16.mxu0 0
        %1711 = vmatpush1.bf16.msra.mxu0 0
        %1712 = vmatprep.subr.bf16.mxu0 0
        %1713 = vmatpush1.bf16.msra.mxu0 0
        %1714 = vmatprep.subr.bf16.mxu0 0
        %1715 = vmatpush1.bf16.msra.mxu0 0
        %1716 = vmatprep.subr.bf16.mxu0 0
        %1717 = vmatpush1.bf16.msra.mxu0 0
        %1718 = vmatprep.subr.bf16.mxu0 0
        %1719 = vmatpush1.bf16.msra.mxu0 0
        %1720 = vmatprep.subr.bf16.mxu0 0
        %1721 = vmatpush1.bf16.msra.mxu0 0
        %1722 = vmatprep.subr.bf16.mxu0 0
        %1723 = vmatpush1.bf16.msra.mxu0 0
        %1724 = vmatprep.subr.bf16.mxu0 0
        %1725 = vmatpush1.bf16.msra.mxu0 0
        %1726 = vmatprep.subr.bf16.mxu0 0
        %1727 = vmatpush1.bf16.msra.mxu0 0
        %1728 = vmatprep.subr.bf16.mxu0 0
        %1729 = vmatpush1.bf16.msra.mxu0 0
        %1730 = vmatprep.subr.bf16.mxu0 0
        %1731 = vmatpush1.bf16.msra.mxu0 0
        %1732 = vmatprep.subr.bf16.mxu0 0
        %1733 = vmatpush1.bf16.msra.mxu0 0
        %1734 = vmatprep.mubr.bf16.mxu0 0
        %1735 = vmatmul.mubr.bf16.gmra.mrb[0].mxu0 %v1697
        %v1736 = vpop.f32.mrb[0].mxu0
        %v1737 = vadd.f32 0.0, %v1736
        %v1738 = vpop.f32.mrb[0].mxu0
        %v1739 = vpop.f32.mrb[0].mxu0
        %v1740 = vpop.f32.mrb[0].mxu0
        %1741 = vdwg.mxu0
        %1742 = vrot.lane.b32.xlu0 %v1080, 104
        %v1743 = vpop.permute.xlu0 %1742
        %1744 = vrot.lane.b32.xlu0 %v1080, 72
        %v1745 = vpop.permute.xlu0 %1744
        %v1747 = vsel %vm1085, %v1743, 0
        %v1750 = vsel %vm1085, %v1745, 0
        %1752 = vmatprep.subr.bf16.mxu0 0
        %1753 = vmatpush1.bf16.xpose.msra.mxu0 %v1750
        %1754 = vmatprep.subr.bf16.mxu0 0
        %1755 = vmatpush1.bf16.xpose.msra.mxu0 0
        %1756 = vmatprep.subr.bf16.mxu0 0
        %1757 = vmatpush1.bf16.xpose.msra.mxu0 0
        %1758 = vmatprep.subr.bf16.mxu0 0
        %1759 = vmatpush1.bf16.xpose.msra.mxu0 0
        %1760 = vmatprep.subr.bf16.mxu0 0
        %1761 = vmatpush1.bf16.xpose.msra.mxu0 0
        %1762 = vmatprep.subr.bf16.mxu0 0
        %1763 = vmatpush1.bf16.xpose.msra.mxu0 0
        %1764 = vmatprep.subr.bf16.mxu0 0
        %1765 = vmatpush1.bf16.xpose.msra.mxu0 0
        %1766 = vmatprep.subr.bf16.mxu0 0
        %1767 = vmatpush1.bf16.xpose.msra.mxu0 0
        %1768 = vmatprep.subr.bf16.mxu0 0
        %1769 = vmatpush1.bf16.xpose.msra.mxu0 0
        %1770 = vmatprep.subr.bf16.mxu0 0
        %1771 = vmatpush1.bf16.xpose.msra.mxu0 0
        %1772 = vmatprep.subr.bf16.mxu0 0
        %1773 = vmatpush1.bf16.xpose.msra.mxu0 0
        %1774 = vmatprep.subr.bf16.mxu0 0
        %1775 = vmatpush1.bf16.xpose.msra.mxu0 0
        %1776 = vmatprep.subr.bf16.mxu0 0
        %1777 = vmatpush1.bf16.xpose.msra.mxu0 0
        %1778 = vmatprep.subr.bf16.mxu0 0
        %1779 = vmatpush1.bf16.xpose.msra.mxu0 0
        %1780 = vmatprep.subr.bf16.mxu0 0
        %1781 = vmatpush1.bf16.xpose.msra.mxu0 0
        %1782 = vmatprep.subr.bf16.mxu0 0
        %1783 = vmatpush1.bf16.xpose.msra.mxu0 0
        %1784 = vmatprep.mubr.bf16.mxu0 0
        %1785 = vmatmul.mubr.bf16.gmra.mrb[0].mxu0 %v1747
        %v1786 = vpop.f32.mrb[0].mxu0
        %v1787 = vadd.f32 0.0, %v1786
        %v1788 = vpop.f32.mrb[0].mxu0
        %v1789 = vpop.f32.mrb[0].mxu0
        %v1790 = vpop.f32.mrb[0].mxu0
        %1791 = vdwg.mxu0
        %1792 = vrot.lane.b32.xlu0 %v1081, 104
        %v1793 = vpop.permute.xlu0 %1792
        %1794 = vrot.lane.b32.xlu0 %v1081, 72
        %v1795 = vpop.permute.xlu0 %1794
        %v1797 = vsel %vm1085, %v1793, 0
        %v1800 = vsel %vm1085, %v1795, 0
        %1802 = vmatprep.subr.bf16.mxu0 0
        %1803 = vmatpush1.bf16.xpose.msra.mxu0 %v1800
        %1804 = vmatprep.subr.bf16.mxu0 0
        %1805 = vmatpush1.bf16.xpose.msra.mxu0 0
        %1806 = vmatprep.subr.bf16.mxu0 0
        %1807 = vmatpush1.bf16.xpose.msra.mxu0 0
        %1808 = vmatprep.subr.bf16.mxu0 0
        %1809 = vmatpush1.bf16.xpose.msra.mxu0 0
        %1810 = vmatprep.subr.bf16.mxu0 0
        %1811 = vmatpush1.bf16.xpose.msra.mxu0 0
        %1812 = vmatprep.subr.bf16.mxu0 0
        %1813 = vmatpush1.bf16.xpose.msra.mxu0 0
        %1814 = vmatprep.subr.bf16.mxu0 0
        %1815 = vmatpush1.bf16.xpose.msra.mxu0 0
        %1816 = vmatprep.subr.bf16.mxu0 0
        %1817 = vmatpush1.bf16.xpose.msra.mxu0 0
        %1818 = vmatprep.subr.bf16.mxu0 0
        %1819 = vmatpush1.bf16.xpose.msra.mxu0 0
        %1820 = vmatprep.subr.bf16.mxu0 0
        %1821 = vmatpush1.bf16.xpose.msra.mxu0 0
        %1822 = vmatprep.subr.bf16.mxu0 0
        %1823 = vmatpush1.bf16.xpose.msra.mxu0 0
        %1824 = vmatprep.subr.bf16.mxu0 0
        %1825 = vmatpush1.bf16.xpose.msra.mxu0 0
        %1826 = vmatprep.subr.bf16.mxu0 0
        %1827 = vmatpush1.bf16.xpose.msra.mxu0 0
        %1828 = vmatprep.subr.bf16.mxu0 0
        %1829 = vmatpush1.bf16.xpose.msra.mxu0 0
        %1830 = vmatprep.subr.bf16.mxu0 0
        %1831 = vmatpush1.bf16.xpose.msra.mxu0 0
        %1832 = vmatprep.subr.bf16.mxu0 0
        %1833 = vmatpush1.bf16.xpose.msra.mxu0 0
        %1834 = vmatprep.mubr.bf16.mxu0 0
        %1835 = vmatmul.mubr.bf16.gmra.mrb[0].mxu0 %v1797
        %v1836 = vpop.f32.mrb[0].mxu0
        %v1837 = vadd.f32 0.0, %v1836
        %v1838 = vpop.f32.mrb[0].mxu0
        %v1839 = vpop.f32.mrb[0].mxu0
        %v1840 = vpop.f32.mrb[0].mxu0
        %1841 = vdwg.mxu0
        %v1842 = vsel %vm1085, %v1787, -inf
        %1843 = vmax.xlane.f32.xlu0 %v1842
        %v1844 = vpop.xlane.xlu0 %1843
        %v1845 = vsel %vm1085, %v1837, -inf
        %1846 = vmax.xlane.f32.xlu0 %v1845
        %v1847 = vpop.xlane.xlu0 %1846
        %v1848 = vsub.f32 %v1787, %v1844
        %v1849 = vsub.f32 %v1837, %v1847
        %v1850 = vmul.f32 %v1848, 1.442695
        %v1851 = vpow.pop %v1850
        %v1852 = vmul.f32 %v1849, 1.442695
        %v1853 = vpow.pop %v1852
        %v1854 = vsel %vm1085, %v1851, 0.0
        %1855 = vadd.xlane.f32.xlu0 %v1854
        %v1856 = vpop.xlane.xlu0 %1855
        %v1857 = vsel %vm1085, %v1853, 0.0
        %1858 = vadd.xlane.f32.xlu0 %v1857
        %v1859 = vpop.xlane.xlu0 %1858
        %v1860 = vrcp.pop %v1856
        %v1861 = vrcp.pop %v1859
        %v1862 = vmul.f32 %v1851, %v1860
        %v1863 = vmul.f32 %v1853, %v1861
        %v1864 = vpack.c.bf16 %v1862, %v1862
        %v1865 = vpack.c.bf16 %v1863, %v1863
        %1866 = vrot.lane.b32.xlu0 %v1080, 40
        %v1867 = vpop.permute.xlu0 %1866
        %v1869 = vsel %vm1085, %v1864, 0
        %v1872 = vsel %vm1210, %v1867, 0
        %1874 = vmatprep.subr.bf16.mxu0 0
        %1875 = vmatpush1.bf16.msra.mxu0 %v1872
        %1876 = vmatprep.subr.bf16.mxu0 0
        %1877 = vmatpush1.bf16.msra.mxu0 0
        %1878 = vmatprep.subr.bf16.mxu0 0
        %1879 = vmatpush1.bf16.msra.mxu0 0
        %1880 = vmatprep.subr.bf16.mxu0 0
        %1881 = vmatpush1.bf16.msra.mxu0 0
        %1882 = vmatprep.subr.bf16.mxu0 0
        %1883 = vmatpush1.bf16.msra.mxu0 0
        %1884 = vmatprep.subr.bf16.mxu0 0
        %1885 = vmatpush1.bf16.msra.mxu0 0
        %1886 = vmatprep.subr.bf16.mxu0 0
        %1887 = vmatpush1.bf16.msra.mxu0 0
        %1888 = vmatprep.subr.bf16.mxu0 0
        %1889 = vmatpush1.bf16.msra.mxu0 0
        %1890 = vmatprep.subr.bf16.mxu0 0
        %1891 = vmatpush1.bf16.msra.mxu0 0
        %1892 = vmatprep.subr.bf16.mxu0 0
        %1893 = vmatpush1.bf16.msra.mxu0 0
        %1894 = vmatprep.subr.bf16.mxu0 0
        %1895 = vmatpush1.bf16.msra.mxu0 0
        %1896 = vmatprep.subr.bf16.mxu0 0
        %1897 = vmatpush1.bf16.msra.mxu0 0
        %1898 = vmatprep.subr.bf16.mxu0 0
        %1899 = vmatpush1.bf16.msra.mxu0 0
        %1900 = vmatprep.subr.bf16.mxu0 0
        %1901 = vmatpush1.bf16.msra.mxu0 0
        %1902 = vmatprep.subr.bf16.mxu0 0
        %1903 = vmatpush1.bf16.msra.mxu0 0
        %1904 = vmatprep.subr.bf16.mxu0 0
        %1905 = vmatpush1.bf16.msra.mxu0 0
        %1906 = vmatprep.mubr.bf16.mxu0 0
        %1907 = vmatmul.mubr.bf16.gmra.mrb[0].mxu0 %v1869
        %v1908 = vpop.f32.mrb[0].mxu0
        %v1909 = vadd.f32 0.0, %v1908
        %v1910 = vpop.f32.mrb[0].mxu0
        %v1911 = vpop.f32.mrb[0].mxu0
        %v1912 = vpop.f32.mrb[0].mxu0
        %1913 = vdwg.mxu0
        %1914 = vrot.lane.b32.xlu0 %v1081, 40
        %v1915 = vpop.permute.xlu0 %1914
        %v1917 = vsel %vm1085, %v1865, 0
        %v1920 = vsel %vm1210, %v1915, 0
        %1922 = vmatprep.subr.bf16.mxu0 0
        %1923 = vmatpush1.bf16.msra.mxu0 %v1920
        %1924 = vmatprep.subr.bf16.mxu0 0
        %1925 = vmatpush1.bf16.msra.mxu0 0
        %1926 = vmatprep.subr.bf16.mxu0 0
        %1927 = vmatpush1.bf16.msra.mxu0 0
        %1928 = vmatprep.subr.bf16.mxu0 0
        %1929 = vmatpush1.bf16.msra.mxu0 0
        %1930 = vmatprep.subr.bf16.mxu0 0
        %1931 = vmatpush1.bf16.msra.mxu0 0
        %1932 = vmatprep.subr.bf16.mxu0 0
        %1933 = vmatpush1.bf16.msra.mxu0 0
        %1934 = vmatprep.subr.bf16.mxu0 0
        %1935 = vmatpush1.bf16.msra.mxu0 0
        %1936 = vmatprep.subr.bf16.mxu0 0
        %1937 = vmatpush1.bf16.msra.mxu0 0
        %1938 = vmatprep.subr.bf16.mxu0 0
        %1939 = vmatpush1.bf16.msra.mxu0 0
        %1940 = vmatprep.subr.bf16.mxu0 0
        %1941 = vmatpush1.bf16.msra.mxu0 0
        %1942 = vmatprep.subr.bf16.mxu0 0
        %1943 = vmatpush1.bf16.msra.mxu0 0
        %1944 = vmatprep.subr.bf16.mxu0 0
        %1945 = vmatpush1.bf16.msra.mxu0 0
        %1946 = vmatprep.subr.bf16.mxu0 0
        %1947 = vmatpush1.bf16.msra.mxu0 0
        %1948 = vmatprep.subr.bf16.mxu0 0
        %1949 = vmatpush1.bf16.msra.mxu0 0
        %1950 = vmatprep.subr.bf16.mxu0 0
        %1951 = vmatpush1.bf16.msra.mxu0 0
        %1952 = vmatprep.subr.bf16.mxu0 0
        %1953 = vmatpush1.bf16.msra.mxu0 0
        %1954 = vmatprep.mubr.bf16.mxu0 0
        %1955 = vmatmul.mubr.bf16.gmra.mrb[0].mxu0 %v1917
        %v1956 = vpop.f32.mrb[0].mxu0
        %v1957 = vadd.f32 0.0, %v1956
        %v1958 = vpop.f32.mrb[0].mxu0
        %v1959 = vpop.f32.mrb[0].mxu0
        %v1960 = vpop.f32.mrb[0].mxu0
        %1961 = vdwg.mxu0
        %1964 = vrot.lane.b32.xlu0 %v1469, 8
        %v1965 = vpop.permute.xlu0 %1964
        %1966 = vrot.lane.b32.xlu0 %v1517, 8
        %v1967 = vpop.permute.xlu0 %1966
        %1972 = vrot.lane.b32.xlu0 %v1689, 16
        %v1973 = vpop.permute.xlu0 %1972
        %1974 = vrot.lane.b32.xlu0 %v1737, 16
        %v1975 = vpop.permute.xlu0 %1974
        %1980 = vrot.lane.b32.xlu0 %v1909, 24
        %v1981 = vpop.permute.xlu0 %1980
        %1982 = vrot.lane.b32.xlu0 %v1957, 24
        %v1983 = vpop.permute.xlu0 %1982
        %v1986 = vsel %vm1085, %v1249, %v1965
        %v1987 = vsel %vm1085, %v1297, %v1967
        %vm1988 = vcmask 130048
        %v1989 = vsel %vm1988, %v1986, %v1973
        %v1990 = vsel %vm1988, %v1987, %v1975
        %vm1991 = vcmask 195584
        %v1992 = vsel %vm1991, %v1989, %v1981
        %v1993 = vsel %vm1991, %v1990, %v1983
        %v1994 = vpack.c.bf16 %v1993, %v1992
        %v1995 = vld [vmem:[%s777] sm:$0xf]
        %v1996 = vld [vmem:[%s777 + $0x4] sm:$0xf]
        %v1997 = vld [vmem:[%s777 + $0x8] sm:$0xf]
        %v1998 = vld [vmem:[%s777 + $0xc] sm:$0xf]
        %v1999 = vld [vmem:[%s785] sm:$0x1]
        %v2001 = vlaneseq
        %v2002 = vshrl.u32 %v2001, 7
        %v2003 = vsub.s32 0, %v2002
        %v2004 = vrot.slane %v1999, %v2003
        %v2010 = vunpack.c.l.b16 %v1995
        %v2011 = vunpack.c.l.b16 %v1996
        %v2012 = vunpack.c.l.b16 %v1997
        %v2013 = vunpack.c.l.b16 %v1998
        %v2014 = vpack.c.b16 %v2011, %v2010
        %v2015 = vpack.c.b16 %v2013, %v2012
        %v2019 = vsel %vm1035, %v1994, 0
        %2021 = vmatprep.subr.bf16.mxu0 0
        %2022 = vmatpush1.bf16.msra.mxu0 %v2014
        %2023 = vmatprep.subr.bf16.mxu0 0
        %2024 = vmatpush1.bf16.msra.mxu0 %v2015
        %2025 = vmatprep.subr.bf16.mxu0 0
        %2026 = vmatpush1.bf16.msra.mxu0 0
        %2027 = vmatprep.subr.bf16.mxu0 0
        %2028 = vmatpush1.bf16.msra.mxu0 0
        %2029 = vmatprep.subr.bf16.mxu0 0
        %2030 = vmatpush1.bf16.msra.mxu0 0
        %2031 = vmatprep.subr.bf16.mxu0 0
        %2032 = vmatpush1.bf16.msra.mxu0 0
        %2033 = vmatprep.subr.bf16.mxu0 0
        %2034 = vmatpush1.bf16.msra.mxu0 0
        %2035 = vmatprep.subr.bf16.mxu0 0
        %2036 = vmatpush1.bf16.msra.mxu0 0
        %2037 = vmatprep.subr.bf16.mxu0 0
        %2038 = vmatpush1.bf16.msra.mxu0 0
        %2039 = vmatprep.subr.bf16.mxu0 0
        %2040 = vmatpush1.bf16.msra.mxu0 0
        %2041 = vmatprep.subr.bf16.mxu0 0
        %2042 = vmatpush1.bf16.msra.mxu0 0
        %2043 = vmatprep.subr.bf16.mxu0 0
        %2044 = vmatpush1.bf16.msra.mxu0 0
        %2045 = vmatprep.subr.bf16.mxu0 0
        %2046 = vmatpush1.bf16.msra.mxu0 0
        %2047 = vmatprep.subr.bf16.mxu0 0
        %2048 = vmatpush1.bf16.msra.mxu0 0
        %2049 = vmatprep.subr.bf16.mxu0 0
        %2050 = vmatpush1.bf16.msra.mxu0 0
        %2051 = vmatprep.subr.bf16.mxu0 0
        %2052 = vmatpush1.bf16.msra.mxu0 0
        %2053 = vmatprep.mubr.bf16.mxu0 0
        %2054 = vmatmul.mubr.bf16.gmra.mrb[0].mxu0 %v2019
        %v2055 = vpop.f32.mrb[0].mxu0
        %v2056 = vadd.f32 %v2004, %v2055
        %v2057 = vpop.f32.mrb[0].mxu0
        %v2058 = vpop.f32.mrb[0].mxu0
        %v2059 = vadd.f32 %v2004, %v2058
        %v2060 = vpop.f32.mrb[0].mxu0
        %2061 = vdwg.mxu0
        %v2062 = vadd.f32 %v1009, %v2056
        %v2063 = vadd.f32 %v1010, %v2059
        %v2064 = vld [vmem:[%s793] sm:$0x1]
        %v2065 = vld [vmem:[%s801] sm:$0x1]
        %v2066 = vsel %vm1035, %v2062, 0.0
        %2067 = vadd.xlane.f32.xlu0 %v2066
        %v2068 = vpop.xlane.xlu0 %2067
        %v2069 = vsel %vm1035, %v2063, 0.0
        %2070 = vadd.xlane.f32.xlu0 %v2069
        %v2071 = vpop.xlane.xlu0 %2070
        %v2072 = vrcp.pop 32.0
        %v2073 = vmul.f32 %v2068, %v2072
        %v2074 = vmul.f32 %v2071, %v2072
        %v2075 = vsub.f32 %v2062, %v2073
        %v2076 = vsub.f32 %v2063, %v2074
        %v2077 = vmul.f32 %v2075, %v2075
        %v2078 = vmul.f32 %v2076, %v2076
        %v2079 = vsel %vm1035, %v2077, 0.0
        %2080 = vadd.xlane.f32.xlu0 %v2079
        %v2081 = vpop.xlane.xlu0 %2080
        %v2082 = vsel %vm1035, %v2078, 0.0
        %2083 = vadd.xlane.f32.xlu0 %v2082
        %v2084 = vpop.xlane.xlu0 %2083
        %v2085 = vmul.f32 %v2081, %v2072
        %v2086 = vmul.f32 %v2084, %v2072
        %v2087 = vadd.f32 %v2085, 1e-05
        %v2088 = vadd.f32 %v2086, 1e-05
        %v2089 = vrsqrt.pop %v2087
        %v2090 = vrsqrt.pop %v2088
        %v2091 = vmul.f32 %v2075, %v2089
        %v2092 = vmul.f32 %v2076, %v2090
        %v2094 = vlaneseq
        %v2095 = vshrl.u32 %v2094, 7
        %v2096 = vsub.s32 0, %v2095
        %v2097 = vrot.slane %v2064, %v2096
        %v2099 = vmul.f32 %v2091, %v2097
        %v2100 = vmul.f32 %v2092, %v2097
        %v2102 = vlaneseq
        %v2103 = vshrl.u32 %v2102, 7
        %v2104 = vsub.s32 0, %v2103
        %v2105 = vrot.slane %v2065, %v2104
        %v2107 = vadd.f32 %v2099, %v2105
        %v2108 = vadd.f32 %v2100, %v2105
        %v2109 = vpack.c.bf16 %v2108, %v2107
        %v2110 = vld [vmem:[%s810] sm:$0xf]
        %v2111 = vld [vmem:[%s810 + $0x4] sm:$0xf]
        %v2112 = vld [vmem:[%s810 + $0x8] sm:$0xf]
        %v2113 = vld [vmem:[%s810 + $0xc] sm:$0xf]
        %v2114 = vld [vmem:[%s818] sm:$0x1]
        %v2116 = vlaneseq
        %v2117 = vshrl.u32 %v2116, 7
        %v2118 = vsub.s32 0, %v2117
        %v2119 = vrot.slane %v2114, %v2118
        %v2125 = vunpack.c.l.b16 %v2110
        %v2126 = vunpack.c.l.b16 %v2111
        %v2127 = vunpack.c.l.b16 %v2112
        %v2128 = vunpack.c.l.b16 %v2113
        %v2129 = vpack.c.b16 %v2126, %v2125
        %v2130 = vpack.c.b16 %v2128, %v2127
        %v2134 = vsel %vm1035, %v2109, 0
        %2136 = vmatprep.subr.bf16.mxu0 0
        %2137 = vmatpush1.bf16.msra.mxu0 %v2129
        %2138 = vmatprep.subr.bf16.mxu0 0
        %2139 = vmatpush1.bf16.msra.mxu0 %v2130
        %2140 = vmatprep.subr.bf16.mxu0 0
        %2141 = vmatpush1.bf16.msra.mxu0 0
        %2142 = vmatprep.subr.bf16.mxu0 0
        %2143 = vmatpush1.bf16.msra.mxu0 0
        %2144 = vmatprep.subr.bf16.mxu0 0
        %2145 = vmatpush1.bf16.msra.mxu0 0
        %2146 = vmatprep.subr.bf16.mxu0 0
        %2147 = vmatpush1.bf16.msra.mxu0 0
        %2148 = vmatprep.subr.bf16.mxu0 0
        %2149 = vmatpush1.bf16.msra.mxu0 0
        %2150 = vmatprep.subr.bf16.mxu0 0
        %2151 = vmatpush1.bf16.msra.mxu0 0
        %2152 = vmatprep.subr.bf16.mxu0 0
        %2153 = vmatpush1.bf16.msra.mxu0 0
        %2154 = vmatprep.subr.bf16.mxu0 0
        %2155 = vmatpush1.bf16.msra.mxu0 0
        %2156 = vmatprep.subr.bf16.mxu0 0
        %2157 = vmatpush1.bf16.msra.mxu0 0
        %2158 = vmatprep.subr.bf16.mxu0 0
        %2159 = vmatpush1.bf16.msra.mxu0 0
        %2160 = vmatprep.subr.bf16.mxu0 0
        %2161 = vmatpush1.bf16.msra.mxu0 0
        %2162 = vmatprep.subr.bf16.mxu0 0
        %2163 = vmatpush1.bf16.msra.mxu0 0
        %2164 = vmatprep.subr.bf16.mxu0 0
        %2165 = vmatpush1.bf16.msra.mxu0 0
        %2166 = vmatprep.subr.bf16.mxu0 0
        %2167 = vmatpush1.bf16.msra.mxu0 0
        %2168 = vmatprep.mubr.bf16.mxu0 0
        %2169 = vmatmul.mubr.bf16.gmra.mrb[0].mxu0 %v2134
        %v2170 = vpop.f32.mrb[0].mxu0
        %v2171 = vadd.f32 %v2119, %v2170
        %v2172 = vpop.f32.mrb[0].mxu0
        %v2173 = vpop.f32.mrb[0].mxu0
        %v2174 = vadd.f32 %v2119, %v2173
        %v2175 = vpop.f32.mrb[0].mxu0
        %2176 = vdwg.mxu0
        %v2177 = vmax.f32 %v2171, 0.0
        %v2178 = vmax.f32 %v2174, 0.0
        %v2179 = vpack.c.bf16 %v2178, %v2177
        %v2180 = vld [vmem:[%s827] sm:$0xf]
        %v2181 = vld [vmem:[%s827 + $0x4] sm:$0xf]
        %v2182 = vld [vmem:[%s827 + $0x8] sm:$0xf]
        %v2183 = vld [vmem:[%s827 + $0xc] sm:$0xf]
        %v2184 = vld [vmem:[%s827 + $0x10] sm:$0xf]
        %v2185 = vld [vmem:[%s827 + $0x14] sm:$0xf]
        %v2186 = vld [vmem:[%s827 + $0x18] sm:$0xf]
        %v2187 = vld [vmem:[%s827 + $0x1c] sm:$0xf]
        %v2188 = vld [vmem:[%s827 + $0x20] sm:$0xf]
        %v2189 = vld [vmem:[%s827 + $0x24] sm:$0xf]
        %v2190 = vld [vmem:[%s827 + $0x28] sm:$0xf]
        %v2191 = vld [vmem:[%s827 + $0x2c] sm:$0xf]
        %v2192 = vld [vmem:[%s827 + $0x30] sm:$0xf]
        %v2193 = vld [vmem:[%s827 + $0x34] sm:$0xf]
        %v2194 = vld [vmem:[%s827 + $0x38] sm:$0xf]
        %v2195 = vld [vmem:[%s827 + $0x3c] sm:$0xf]
        %v2196 = vld [vmem:[%s835] sm:$0x1]
        %v2198 = vlaneseq
        %v2199 = vshrl.u32 %v2198, 7
        %v2200 = vsub.s32 0, %v2199
        %v2201 = vrot.slane %v2196, %v2200
        %v2219 = vunpack.c.l.b16 %v2180
        %v2220 = vunpack.c.l.b16 %v2181
        %v2221 = vunpack.c.l.b16 %v2182
        %v2222 = vunpack.c.l.b16 %v2183
        %v2223 = vunpack.c.l.b16 %v2184
        %v2224 = vunpack.c.l.b16 %v2185
        %v2225 = vunpack.c.l.b16 %v2186
        %v2226 = vunpack.c.l.b16 %v2187
        %v2227 = vunpack.c.l.b16 %v2188
        %v2228 = vunpack.c.l.b16 %v2189
        %v2229 = vunpack.c.l.b16 %v2190
        %v2230 = vunpack.c.l.b16 %v2191
        %v2231 = vunpack.c.l.b16 %v2192
        %v2232 = vunpack.c.l.b16 %v2193
        %v2233 = vunpack.c.l.b16 %v2194
        %v2234 = vunpack.c.l.b16 %v2195
        %v2235 = vpack.c.b16 %v2220, %v2219
        %v2236 = vpack.c.b16 %v2222, %v2221
        %v2237 = vpack.c.b16 %v2224, %v2223
        %v2238 = vpack.c.b16 %v2226, %v2225
        %v2239 = vpack.c.b16 %v2228, %v2227
        %v2240 = vpack.c.b16 %v2230, %v2229
        %v2241 = vpack.c.b16 %v2232, %v2231
        %v2242 = vpack.c.b16 %v2234, %v2233
        %2251 = vmatprep.subr.bf16.mxu0 0
        %2252 = vmatpush1.bf16.msra.mxu0 %v2235
        %2253 = vmatprep.subr.bf16.mxu0 0
        %2254 = vmatpush1.bf16.msra.mxu0 %v2236
        %2255 = vmatprep.subr.bf16.mxu0 0
        %2256 = vmatpush1.bf16.msra.mxu0 %v2237
        %2257 = vmatprep.subr.bf16.mxu0 0
        %2258 = vmatpush1.bf16.msra.mxu0 %v2238
        %2259 = vmatprep.subr.bf16.mxu0 0
        %2260 = vmatpush1.bf16.msra.mxu0 %v2239
        %2261 = vmatprep.subr.bf16.mxu0 0
        %2262 = vmatpush1.bf16.msra.mxu0 %v2240
        %2263 = vmatprep.subr.bf16.mxu0 0
        %2264 = vmatpush1.bf16.msra.mxu0 %v2241
        %2265 = vmatprep.subr.bf16.mxu0 0
        %2266 = vmatpush1.bf16.msra.mxu0 %v2242
        %2267 = vmatprep.subr.bf16.mxu0 0
        %2268 = vmatpush1.bf16.msra.mxu0 0
        %2269 = vmatprep.subr.bf16.mxu0 0
        %2270 = vmatpush1.bf16.msra.mxu0 0
        %2271 = vmatprep.subr.bf16.mxu0 0
        %2272 = vmatpush1.bf16.msra.mxu0 0
        %2273 = vmatprep.subr.bf16.mxu0 0
        %2274 = vmatpush1.bf16.msra.mxu0 0
        %2275 = vmatprep.subr.bf16.mxu0 0
        %2276 = vmatpush1.bf16.msra.mxu0 0
        %2277 = vmatprep.subr.bf16.mxu0 0
        %2278 = vmatpush1.bf16.msra.mxu0 0
        %2279 = vmatprep.subr.bf16.mxu0 0
        %2280 = vmatpush1.bf16.msra.mxu0 0
        %2281 = vmatprep.subr.bf16.mxu0 0
        %2282 = vmatpush1.bf16.msra.mxu0 0
        %2283 = vmatprep.mubr.bf16.mxu0 0
        %2284 = vmatmul.mubr.bf16.gmra.mrb[0].mxu0 %v2179
        %v2285 = vpop.f32.mrb[0].mxu0
        %v2286 = vadd.f32 %v2201, %v2285
        %v2287 = vpop.f32.mrb[0].mxu0
        %v2288 = vpop.f32.mrb[0].mxu0
        %v2289 = vadd.f32 %v2201, %v2288
        %v2290 = vpop.f32.mrb[0].mxu0
        %2291 = vdwg.mxu0
        %v2292 = vadd.f32 %v2107, %v2286
        %v2293 = vadd.f32 %v2108, %v2289
        %v2294 = vld [vmem:[%s843] sm:$0x1]
        %v2295 = vld [vmem:[%s851] sm:$0x1]
        %v2296 = vsel %vm1035, %v2292, 0.0
        %2297 = vadd.xlane.f32.xlu0 %v2296
        %v2298 = vpop.xlane.xlu0 %2297
        %v2299 = vsel %vm1035, %v2293, 0.0
        %2300 = vadd.xlane.f32.xlu0 %v2299
        %v2301 = vpop.xlane.xlu0 %2300
        %v2302 = vmul.f32 %v2298, %v2072
        %v2303 = vmul.f32 %v2301, %v2072
        %v2304 = vsub.f32 %v2292, %v2302
        %v2305 = vsub.f32 %v2293, %v2303
        %v2306 = vmul.f32 %v2304, %v2304
        %v2307 = vmul.f32 %v2305, %v2305
        %v2308 = vsel %vm1035, %v2306, 0.0
        %2309 = vadd.xlane.f32.xlu0 %v2308
        %v2310 = vpop.xlane.xlu0 %2309
        %v2311 = vsel %vm1035, %v2307, 0.0
        %2312 = vadd.xlane.f32.xlu0 %v2311
        %v2313 = vpop.xlane.xlu0 %2312
        %v2314 = vmul.f32 %v2310, %v2072
        %v2315 = vmul.f32 %v2313, %v2072
        %v2316 = vadd.f32 %v2314, 1e-05
        %v2317 = vadd.f32 %v2315, 1e-05
        %v2318 = vrsqrt.pop %v2316
        %v2319 = vrsqrt.pop %v2317
        %v2320 = vmul.f32 %v2304, %v2318
        %v2321 = vmul.f32 %v2305, %v2319
        %v2323 = vlaneseq
        %v2324 = vshrl.u32 %v2323, 7
        %v2325 = vsub.s32 0, %v2324
        %v2326 = vrot.slane %v2294, %v2325
        %v2328 = vmul.f32 %v2320, %v2326
        %v2329 = vmul.f32 %v2321, %v2326
        %v2331 = vlaneseq
        %v2332 = vshrl.u32 %v2331, 7
        %v2333 = vsub.s32 0, %v2332
        %v2334 = vrot.slane %v2295, %v2333
        %v2336 = vadd.f32 %v2328, %v2334
        %v2337 = vadd.f32 %v2329, %v2334
        %2338 = vst.msk [vmem:[#allocation2] sm:$0xff] %vm1035, %v2336
        %2339 = vst.msk [vmem:[#allocation2 + $0x8] sm:$0xff] %vm1035, %v2337
        %p2340 = scmp.eq.s32.totalorder %s52, 1
        // Predicated region
        $region145: #{tpu_custom_call.1} parent=79 // pred_check
          %p2341 = pneg %p2340
        $region146: #{tpu_custom_call.1} parent=79 // pred_check_branch
          %2343 = sbr.rel (%p2341) target = $region148
        $region147: #{tpu_custom_call.1} parent=79 // pred_region
          %s2344 = scalar_lea.vmem [#allocation2], 7
          %v2345 = vld [vmem:[%s2344] ss:$8 sm:$0x3]
          %vm2346 = vcmask 254976
          %2347 = vst.msk [vmem:[#allocation27] sm:$0x3] %vm2346, %v2345
        $region148: #{tpu_custom_call.1} parent=79 // pred_fallthru
          _
        // Predicated region
        $region149: #{tpu_custom_call.1} parent=79 // pred_check
          %p2348 = pneg %p457
        $region150: #{tpu_custom_call.1} parent=79 // pred_check_branch
          %2350 = sbr.rel (%p2348) target = $region152
        $region151: #{tpu_custom_call.1} parent=79 // pred_region
          %s2352 = ssub.s32 32, 32
          %2353 = vsyncadd [#allocation5], %s2352
          %s2354 = smul.addr %s51, 32
          %s2355 = scalar_lea.hbm %s15, %s2354
          %s2357 = sshll.u32 [#allocation27], 4
          %s2358 = int_to_ptr.vmem [resolvable:$true] %s2357
          %2360 = dma.vmem_to_hbm [thread:$0]  %s2358, 32, %s2355, [#allocation5]
        $region152: #{tpu_custom_call.1} parent=79 // pred_fallthru
          _
        // Predicated region
        $region153: #{tpu_custom_call.1} parent=79 // pred_check
          %p2361 = pneg %p457
        $region154: #{tpu_custom_call.1} parent=79 // pred_check_branch
          %2363 = sbr.rel (%p2361) target = $region156
        $region155: #{tpu_custom_call.1} parent=79 // pred_region
          %2364 = dma.done [#allocation5], 32
        $region156: #{tpu_custom_call.1} parent=79 // pred_fallthru
          _
      $region80: #{tpu_custom_call.1} parent=5 // pred_fallthru
        _
      %p2365 = scmp.le.s32.totalorder 2, %s42
      // Predicated region
      $region157: #{tpu_custom_call.1} parent=5 // pred_check
        %p2366 = pneg %p2365
      $region158: #{tpu_custom_call.1} parent=5 // pred_check_branch
        %2368 = sbr.rel (%p2366) target = $region160
      $region159: #{tpu_custom_call.1} parent=5 // pred_region
        %s2369 = ssub.s32 %s42, 2
      $region160: #{tpu_custom_call.1} parent=5 // pred_fallthru
        _
    $region6: #{tpu_custom_call.1} parent=1 // loop_footer
      %s46 = sadd.s32 1, %s42
    $region7: #{tpu_custom_call.1} parent=1 // loop_footer_branch
      %41 = sbr.rel target = $region3
    $region8: #{tpu_custom_call.1} parent=1 // loop_exit
      _
    %2370 = vsyncpa [#allocation4], 1
    %s2371 = scalar_lea.sflag [#allocation4], 1
    %2372 = vsyncpa %s2371, 1
    %2373 = vsyncpa [#allocation7], 1
    %2374 = vsyncpa [#allocation10], 1
    %s2375 = scalar_lea.sflag [#allocation10], 1
    %2376 = vsyncpa %s2375, 1
    %2377 = vsyncpa [#allocation13], 1
    %s2378 = scalar_lea.sflag [#allocation13], 1
    %2379 = vsyncpa %s2378, 1
    %2380 = vsyncpa [#allocation16], 1
    %s2381 = scalar_lea.sflag [#allocation16], 1
    %2382 = vsyncpa %s2381, 1
    %2383 = vsyncpa [#allocation19], 1
    %s2384 = scalar_lea.sflag [#allocation19], 1
    %2385 = vsyncpa %s2384, 1
    %2386 = vsyncpa [#allocation22], 1
    %s2387 = scalar_lea.sflag [#allocation22], 1
    %2388 = vsyncpa %s2387, 1
    %2389 = vsyncpa [#allocation25], 1
    %s2390 = scalar_lea.sflag [#allocation25], 1
    %2391 = vsyncpa %s2390, 1
    %2392 = vsyncpa [#allocation5], 1
    %s2393 = scalar_lea.sflag [#allocation5], 1
    %2394 = vsyncpa %s2393, 1

</llo_original>
